<compile_context>
chip_gen: v5e
topology: v5e:2x2
jax: 0.10.0
libtpu: 0.0.40
codegen_flags: <defaults>
</compile_context>

<pallas_src>
import jax
import jax.numpy as jnp
from jax import lax
from jax.experimental import pallas as pl
from jax.experimental.pallas import tpu as pltpu


def _vmem_spec():
    return pl.BlockSpec(memory_space=pltpu.MemorySpace.VMEM)


# ----------------------------- fused Pallas kernel ------------------------------

def _make_fused_kernel(kernel_sizes, hidden_size):
    n_conv = len(kernel_sizes)
    H = hidden_size

    def kernel(*refs):
        # ref layout (inputs..., output):
        #   x1 (B,L,E), x2 (B,T,1),
        #   conv_w_flat[ci] (K*E, C) * n_conv, conv_b[ci] (1, C) * n_conv,
        #   w_ih (1,4H), w_hh (H,4H), lstm_b (1,4H),
        #   fc_w_conv[ci] (C, O_pad) * n_conv, fc_w_lstm (H, O_pad), fc_b (1, O_pad),
        #   out (B, O_pad)
        x1_ref, x2_ref = refs[0], refs[1]
        rest = refs[2:]
        conv_w = rest[:n_conv]; rest = rest[n_conv:]
        conv_b = rest[:n_conv]; rest = rest[n_conv:]
        wih_ref, whh_ref, lstmb_ref = rest[:3]; rest = rest[3:]
        fcw_conv = rest[:n_conv]; rest = rest[n_conv:]
        fcw_lstm_ref, fcb_ref, out_ref = rest

        x1 = x1_ref[...]                               # (B, L, E)
        B, L, _ = x1.shape

        # FC accumulator, lane-dense padded width. Pad bias lanes are -1e30.
        z = fcb_ref[...]                               # (1, O_pad) -> broadcasts on add

        # ---- CNN branch: im2col -> one matmul per kernel size -> ReLU -> max ----
        for ci, K in enumerate(kernel_sizes):
            Lout = L - K + 1
            # (B, Lout, K*E): static slices concatenated along the contraction axis.
            cols = jnp.concatenate([x1[:, k:k + Lout, :] for k in range(K)], axis=2)
            acc = jnp.einsum('blf,fc->blc', cols, conv_w[ci][...],
                             preferred_element_type=jnp.float32)   # (B, Lout, C)
            acc = jnp.maximum(acc + conv_b[ci][...][None, :, :], 0.0)
            feat = jnp.max(acc, axis=1)                             # (B, C)
            z = z + jnp.dot(feat, fcw_conv[ci][...],
                            preferred_element_type=jnp.float32)

        # ---- LSTM branch: precomputed input projection, vreg-carried state ----
        x2 = x2_ref[...]                                            # (B, T, 1)
        T = x2.shape[1]
        # x * W_ih^T + (b_ih + b_hh), all timesteps at once: (B, T, 4H)
        xw = x2 * wih_ref[...][None, :, :] + lstmb_ref[...][None, :, :]
        w_hh = whh_ref[...]                                         # (H, 4H)
        h = jnp.zeros((B, H), jnp.float32)
        c = jnp.zeros((B, H), jnp.float32)
        for t in range(T):                                          # static full unroll
            gates = xw[:, t, :] + jnp.dot(h, w_hh,
                                          preferred_element_type=jnp.float32)  # (B, 4H)
            sig = jax.nn.sigmoid(gates)      # whole-vreg EUP
            th = jnp.tanh(gates)             # whole-vreg EUP
            i_g = sig[:, 0 * H:1 * H]        # PyTorch gate order: i, f, g, o
            f_g = sig[:, 1 * H:2 * H]
            g_g = th[:, 2 * H:3 * H]
            o_g = sig[:, 3 * H:4 * H]
            c = f_g * c + i_g * g_g
            h = o_g * jnp.tanh(c)
        z = z + jnp.dot(h, fcw_lstm_ref[...], preferred_element_type=jnp.float32)

        # ---- log_softmax over the padded lane dim (pad lanes -> exp underflows to 0) ----
        m = jnp.max(z, axis=1, keepdims=True)
        s = z - m
        lse = jnp.log(jnp.sum(jnp.exp(s), axis=1, keepdims=True))
        out_ref[...] = s - lse

    return kernel


# ------------------------------- model ---------------------------------------

class CNNClassifierPallas:
    def __init__(self, key, vocab_size, embedding_dim, output_size,
                 kernel_dim, kernel_sizes, hidden_size, num_layers=1):
        assert num_layers == 1  # TODO(synk): only single-layer LSTM implemented.
        self.embedding_dim = embedding_dim
        self.kernel_sizes = tuple(kernel_sizes)
        self.kernel_dim = kernel_dim
        self.hidden_size = hidden_size
        self.output_size = output_size

        n_keys = 2 * len(kernel_sizes) + 4 + 2 + 2
        keys = list(jax.random.split(key, n_keys))

        def nxt():
            return keys.pop()

        # Embedding tables exist for parameter parity but are unused in forward().
        self.embedding = 0.1 * jax.random.normal(nxt(), (vocab_size, embedding_dim), jnp.float32)
        self.embedding2 = 0.1 * jax.random.normal(nxt(), (15, 20), jnp.float32)

        # Conv2d(1, kernel_dim, (K, embedding_dim)) weights: (C, K, E), bias (C,)
        self.conv_params = []
        for K in self.kernel_sizes:
            W = 0.1 * jax.random.normal(nxt(), (kernel_dim, K, embedding_dim), jnp.float32)
            b = 0.1 * jax.random.normal(nxt(), (kernel_dim,), jnp.float32)
            self.conv_params.append((W, b))

        # LSTM(input_size=1, hidden_size, 1 layer)
        H = hidden_size
        self.w_ih = 0.1 * jax.random.normal(nxt(), (4 * H, 1), jnp.float32)
        self.w_hh = 0.1 * jax.random.normal(nxt(), (4 * H, H), jnp.float32)
        self.b_ih = 0.1 * jax.random.normal(nxt(), (4 * H,), jnp.float32)
        self.b_hh = 0.1 * jax.random.normal(nxt(), (4 * H,), jnp.float32)

        # fc_cnn_lstm: Linear(len(ks)*kernel_dim + H, output_size)
        F = len(self.kernel_sizes) * kernel_dim + H
        self.fc_w = 0.1 * jax.random.normal(nxt(), (output_size, F), jnp.float32)
        self.fc_b = 0.1 * jax.random.normal(nxt(), (output_size,), jnp.float32)

        # Kernel-layout parameters: computed ONCE (review: hoist per-call transposes).
        self._prepare_kernel_params()
        self._forward = self._build_forward()

    def _prepare_kernel_params(self):
        C = self.kernel_dim
        E = self.embedding_dim
        H = self.hidden_size
        O = self.output_size
        self.out_pad = ((O + 127) // 128) * 128   # lane-dense FC output width

        # conv: (C, K, E) -> (K*E, C) flat im2col weight; bias -> (1, C)
        self._conv_w_flat = []
        self._conv_b_row = []
        for (W, b), K in zip(self.conv_params, self.kernel_sizes):
            self._conv_w_flat.append(jnp.transpose(W, (1, 2, 0)).reshape(K * E, C))
            self._conv_b_row.append(b.reshape(1, C))

        # LSTM: (4H,1)->(1,4H); (4H,H)->(H,4H); combined bias (1,4H)
        self._wih_row = self.w_ih.reshape(1, 4 * H)
        self._whh_t = self.w_hh.T
        self._lstm_b = (self.b_ih + self.b_hh).reshape(1, 4 * H)

        # FC: split weight by feature group (avoids in-kernel concat), pad O -> out_pad.
        pad = self.out_pad - O
        fc_wt = self.fc_w.T                                          # (F, O)
        self._fc_w_conv = []
        for ci in range(len(self.kernel_sizes)):
            w = fc_wt[ci * C:(ci + 1) * C, :]
            self._fc_w_conv.append(jnp.pad(w, ((0, 0), (0, pad))))   # (C, out_pad)
        self._fc_w_lstm = jnp.pad(fc_wt[len(self.kernel_sizes) * C:, :],
                                  ((0, 0), (0, pad)))                # (H, out_pad)
        # Pad lanes of the bias get -1e30 so log_softmax ignores them.
        self._fc_b_pad = jnp.concatenate(
            [self.fc_b.reshape(1, O), jnp.full((1, pad), -1e30, jnp.float32)], axis=1)

    def _build_forward(self):
        kernel = _make_fused_kernel(self.kernel_sizes, self.hidden_size)
        params = (list(self._conv_w_flat) + list(self._conv_b_row)
                  + [self._wih_row, self._whh_t, self._lstm_b]
                  + list(self._fc_w_conv) + [self._fc_w_lstm, self._fc_b_pad])
        n_in = 2 + len(params)
        out_pad = self.out_pad
        O = self.output_size

        def fwd(inputs1, inputs2):
            B = inputs1.shape[0]
            # TODO(synk): at real problem sizes (E~400, large B), add a batch grid with
            # BlockSpec tiling + dimension_semantics=("parallel",) for v7x's 2 TCs.
            out = pl.pallas_call(
                kernel,
                out_shape=jax.ShapeDtypeStruct((B, out_pad), jnp.float32),
                in_specs=[_vmem_spec()] * n_in,
                out_specs=_vmem_spec(),
            )(inputs1, inputs2, *params)
            return out[:, :O]

        return jax.jit(fwd)

    def forward(self, inputs1, inputs2):
        # inputs1: (B, L, E) float32 ; inputs2: (B, T, 1) float32
        # TODO(synk): nn.Dropout(0.5) applied as identity (eval/inference mode).
        return self._forward(inputs1, inputs2)


# --------------------------- pure-JAX reference -------------------------------

def reference_forward(model, inputs1, inputs2):
    feats = []
    for W, b in model.conv_params:
        C, K, E = W.shape
        Lout = inputs1.shape[1] - K + 1
        acc = jnp.zeros((inputs1.shape[0], Lout, C), jnp.float32)
        for k in range(K):
            acc = acc + jnp.einsum('ble,ce->blc', inputs1[:, k:k + Lout, :], W[:, k, :])
        acc = jnp.maximum(acc + b[None, None, :], 0.0)
        feats.append(jnp.max(acc, axis=1))
    concated1 = jnp.concatenate(feats, axis=1)

    H = model.hidden_size
    B = inputs2.shape[0]

    def step(carry, x_t):
        h, c = carry
        gates = x_t @ model.w_ih.T + h @ model.w_hh.T + model.b_ih + model.b_hh
        i = jax.nn.sigmoid(gates[:, :H])
        f = jax.nn.sigmoid(gates[:, H:2 * H])
        g = jnp.tanh(gates[:, 2 * H:3 * H])
        o = jax.nn.sigmoid(gates[:, 3 * H:4 * H])
        c = f * c + i * g
        h = o * jnp.tanh(c)
        return (h, c), None

    (h, _), _ = lax.scan(step, (jnp.zeros((B, H), jnp.float32),
                                jnp.zeros((B, H), jnp.float32)),
                         jnp.transpose(inputs2, (1, 0, 2)))

    concated = jnp.concatenate([concated1, h], axis=1)
    z = concated @ model.fc_w.T + model.fc_b
    return jax.nn.log_softmax(z, axis=1)


# --------------------------------- main ---------------------------------------

if __name__ == "__main__":
    key = jax.random.PRNGKey(0)
    B, L, E = 2, 16, 128         # batch, text length, embedding dim (lane-aligned stand-in for 400)
    T, H = 8, 32                 # LSTM seq length, hidden size
    kernel_sizes = (3, 4, 5)
    kernel_dim = 8
    output_size = 29             # num_classes

    k_model, k_x1, k_x2 = jax.random.split(key, 3)
    model = CNNClassifierPallas(k_model, vocab_size=output_size + 1, embedding_dim=E,
                                output_size=output_size, kernel_dim=kernel_dim,
                                kernel_sizes=kernel_sizes, hidden_size=H, num_layers=1)

    inputs1 = jax.random.normal(k_x1, (B, L, E), jnp.float32)
    inputs2 = jax.random.normal(k_x2, (B, T, 1), jnp.float32)

    out = model.forward(inputs1, inputs2)
    out = jax.block_until_ready(out)

    ref = reference_forward(model, inputs1, inputs2)
    assert out.shape == (B, output_size), out.shape
    max_err = float(jnp.max(jnp.abs(out - ref)))
    assert jnp.allclose(out, ref, atol=2e-3, rtol=2e-3), f"max_err={max_err}"

    print("KERNEL_OK")
</pallas_src>

<mosaic_0001>
module attributes {stable_mosaic.version = 11 : i64} {
  func.func @kernel(%arg0: memref<2x16x128xf32, #tpu.memory_space<vmem>>, %arg1: memref<2x8x1xf32, #tpu.memory_space<vmem>>, %arg2: memref<384x8xf32, #tpu.memory_space<vmem>>, %arg3: memref<512x8xf32, #tpu.memory_space<vmem>>, %arg4: memref<640x8xf32, #tpu.memory_space<vmem>>, %arg5: memref<1x8xf32, #tpu.memory_space<vmem>>, %arg6: memref<1x8xf32, #tpu.memory_space<vmem>>, %arg7: memref<1x8xf32, #tpu.memory_space<vmem>>, %arg8: memref<1x128xf32, #tpu.memory_space<vmem>>, %arg9: memref<32x128xf32, #tpu.memory_space<vmem>>, %arg10: memref<1x128xf32, #tpu.memory_space<vmem>>, %arg11: memref<8x128xf32, #tpu.memory_space<vmem>>, %arg12: memref<8x128xf32, #tpu.memory_space<vmem>>, %arg13: memref<8x128xf32, #tpu.memory_space<vmem>>, %arg14: memref<32x128xf32, #tpu.memory_space<vmem>>, %arg15: memref<1x128xf32, #tpu.memory_space<vmem>>, %arg16: memref<2x128xf32, #tpu.memory_space<vmem>>) attributes {dimension_semantics = [], scalar_prefetch = 0 : i64, scratch_operands = 0 : i64, tpu.core_type = #tpu.core_type<tc>} {
    %c0 = arith.constant 0 : index
    %c0_0 = arith.constant 0 : index
    %c0_1 = arith.constant 0 : index
    %0 = vector.load %arg0[%c0, %c0_0, %c0_1] : memref<2x16x128xf32, #tpu.memory_space<vmem>>, vector<2x16x128xf32>
    %c0_2 = arith.constant 0 : index
    %c0_3 = arith.constant 0 : index
    %1 = vector.load %arg15[%c0_2, %c0_3] : memref<1x128xf32, #tpu.memory_space<vmem>>, vector<1x128xf32>
    %2 = vector.extract_strided_slice %0 {offsets = [0, 0, 0], sizes = [2, 14, 128], strides = [1, 1, 1]} : vector<2x16x128xf32> to vector<2x14x128xf32>
    %3 = vector.extract_strided_slice %0 {offsets = [0, 1, 0], sizes = [2, 14, 128], strides = [1, 1, 1]} : vector<2x16x128xf32> to vector<2x14x128xf32>
    %4 = vector.extract_strided_slice %0 {offsets = [0, 2, 0], sizes = [2, 14, 128], strides = [1, 1, 1]} : vector<2x16x128xf32> to vector<2x14x128xf32>
    %5 = tpu.concatenate %2, %3, %4 in 2 : vector<2x14x128xf32>, vector<2x14x128xf32>, vector<2x14x128xf32> -> vector<2x14x384xf32>
    %c0_4 = arith.constant 0 : index
    %c0_5 = arith.constant 0 : index
    %6 = vector.load %arg2[%c0_4, %c0_5] : memref<384x8xf32, #tpu.memory_space<vmem>>, vector<384x8xf32>
    "tpu.trace_start"() <{level = 10 : i32, message = "blf,fc->blc"}> : () -> ()
    %cst = arith.constant dense<0.000000e+00> : vector<2x14x8xf32>
    %7 = tpu.matmul %5, %6, %cst {dimension_numbers = #tpu.dot_dimension_numbers<[2], [0], [0, 1], [1], [0, 0, 0, 1, 1, 1], [], []>} : vector<2x14x384xf32>, vector<384x8xf32>, vector<2x14x8xf32> -> vector<2x14x8xf32>
    "tpu.trace_stop"() : () -> ()
    %c0_6 = arith.constant 0 : index
    %c0_7 = arith.constant 0 : index
    %8 = vector.load %arg5[%c0_6, %c0_7] : memref<1x8xf32, #tpu.memory_space<vmem>>, vector<1x8xf32>
    %9 = vector.shape_cast %8 : vector<1x8xf32> to vector<1x1x8xf32>
    %10 = vector.broadcast %9 : vector<1x1x8xf32> to vector<2x14x8xf32>
    %11 = arith.addf %7, %10 : vector<2x14x8xf32>
    %cst_8 = arith.constant 0.000000e+00 : f32
    %12 = vector.broadcast %cst_8 : f32 to vector<2x14x8xf32>
    %13 = arith.maximumf %11, %12 : vector<2x14x8xf32>
    %cst_9 = arith.constant dense<0xFF800000> : vector<2x8xf32>
    %14 = vector.multi_reduction <maximumf>, %13, %cst_9 [1] : vector<2x14x8xf32> to vector<2x8xf32>
    %c0_10 = arith.constant 0 : index
    %c0_11 = arith.constant 0 : index
    %15 = vector.load %arg11[%c0_10, %c0_11] : memref<8x128xf32, #tpu.memory_space<vmem>>, vector<8x128xf32>
    %cst_12 = arith.constant dense<0.000000e+00> : vector<2x128xf32>
    %16 = tpu.matmul %14, %15, %cst_12 {dimension_numbers = #tpu.dot_dimension_numbers<[1], [0], [0], [1], [0, 0, 1, 1], [], []>} : vector<2x8xf32>, vector<8x128xf32>, vector<2x128xf32> -> vector<2x128xf32>
    %17 = vector.broadcast %1 : vector<1x128xf32> to vector<2x128xf32>
    %18 = arith.addf %17, %16 : vector<2x128xf32>
    %19 = vector.extract_strided_slice %0 {offsets = [0, 0, 0], sizes = [2, 13, 128], strides = [1, 1, 1]} : vector<2x16x128xf32> to vector<2x13x128xf32>
    %20 = vector.extract_strided_slice %0 {offsets = [0, 1, 0], sizes = [2, 13, 128], strides = [1, 1, 1]} : vector<2x16x128xf32> to vector<2x13x128xf32>
    %21 = vector.extract_strided_slice %0 {offsets = [0, 2, 0], sizes = [2, 13, 128], strides = [1, 1, 1]} : vector<2x16x128xf32> to vector<2x13x128xf32>
    %22 = vector.extract_strided_slice %0 {offsets = [0, 3, 0], sizes = [2, 13, 128], strides = [1, 1, 1]} : vector<2x16x128xf32> to vector<2x13x128xf32>
    %23 = tpu.concatenate %19, %20, %21, %22 in 2 : vector<2x13x128xf32>, vector<2x13x128xf32>, vector<2x13x128xf32>, vector<2x13x128xf32> -> vector<2x13x512xf32>
    %c0_13 = arith.constant 0 : index
    %c0_14 = arith.constant 0 : index
    %24 = vector.load %arg3[%c0_13, %c0_14] : memref<512x8xf32, #tpu.memory_space<vmem>>, vector<512x8xf32>
    "tpu.trace_start"() <{level = 10 : i32, message = "blf,fc->blc"}> : () -> ()
    %cst_15 = arith.constant dense<0.000000e+00> : vector<2x13x8xf32>
    %25 = tpu.matmul %23, %24, %cst_15 {dimension_numbers = #tpu.dot_dimension_numbers<[2], [0], [0, 1], [1], [0, 0, 0, 1, 1, 1], [], []>} : vector<2x13x512xf32>, vector<512x8xf32>, vector<2x13x8xf32> -> vector<2x13x8xf32>
    "tpu.trace_stop"() : () -> ()
    %c0_16 = arith.constant 0 : index
    %c0_17 = arith.constant 0 : index
    %26 = vector.load %arg6[%c0_16, %c0_17] : memref<1x8xf32, #tpu.memory_space<vmem>>, vector<1x8xf32>
    %27 = vector.shape_cast %26 : vector<1x8xf32> to vector<1x1x8xf32>
    %28 = vector.broadcast %27 : vector<1x1x8xf32> to vector<2x13x8xf32>
    %29 = arith.addf %25, %28 : vector<2x13x8xf32>
    %cst_18 = arith.constant 0.000000e+00 : f32
    %30 = vector.broadcast %cst_18 : f32 to vector<2x13x8xf32>
    %31 = arith.maximumf %29, %30 : vector<2x13x8xf32>
    %cst_19 = arith.constant dense<0xFF800000> : vector<2x8xf32>
    %32 = vector.multi_reduction <maximumf>, %31, %cst_19 [1] : vector<2x13x8xf32> to vector<2x8xf32>
    %c0_20 = arith.constant 0 : index
    %c0_21 = arith.constant 0 : index
    %33 = vector.load %arg12[%c0_20, %c0_21] : memref<8x128xf32, #tpu.memory_space<vmem>>, vector<8x128xf32>
    %cst_22 = arith.constant dense<0.000000e+00> : vector<2x128xf32>
    %34 = tpu.matmul %32, %33, %cst_22 {dimension_numbers = #tpu.dot_dimension_numbers<[1], [0], [0], [1], [0, 0, 1, 1], [], []>} : vector<2x8xf32>, vector<8x128xf32>, vector<2x128xf32> -> vector<2x128xf32>
    %35 = arith.addf %18, %34 : vector<2x128xf32>
    %36 = vector.extract_strided_slice %0 {offsets = [0, 0, 0], sizes = [2, 12, 128], strides = [1, 1, 1]} : vector<2x16x128xf32> to vector<2x12x128xf32>
    %37 = vector.extract_strided_slice %0 {offsets = [0, 1, 0], sizes = [2, 12, 128], strides = [1, 1, 1]} : vector<2x16x128xf32> to vector<2x12x128xf32>
    %38 = vector.extract_strided_slice %0 {offsets = [0, 2, 0], sizes = [2, 12, 128], strides = [1, 1, 1]} : vector<2x16x128xf32> to vector<2x12x128xf32>
    %39 = vector.extract_strided_slice %0 {offsets = [0, 3, 0], sizes = [2, 12, 128], strides = [1, 1, 1]} : vector<2x16x128xf32> to vector<2x12x128xf32>
    %40 = vector.extract_strided_slice %0 {offsets = [0, 4, 0], sizes = [2, 12, 128], strides = [1, 1, 1]} : vector<2x16x128xf32> to vector<2x12x128xf32>
    %41 = tpu.concatenate %36, %37, %38, %39, %40 in 2 : vector<2x12x128xf32>, vector<2x12x128xf32>, vector<2x12x128xf32>, vector<2x12x128xf32>, vector<2x12x128xf32> -> vector<2x12x640xf32>
    %c0_23 = arith.constant 0 : index
    %c0_24 = arith.constant 0 : index
    %42 = vector.load %arg4[%c0_23, %c0_24] : memref<640x8xf32, #tpu.memory_space<vmem>>, vector<640x8xf32>
    "tpu.trace_start"() <{level = 10 : i32, message = "blf,fc->blc"}> : () -> ()
    %cst_25 = arith.constant dense<0.000000e+00> : vector<2x12x8xf32>
    %43 = tpu.matmul %41, %42, %cst_25 {dimension_numbers = #tpu.dot_dimension_numbers<[2], [0], [0, 1], [1], [0, 0, 0, 1, 1, 1], [], []>} : vector<2x12x640xf32>, vector<640x8xf32>, vector<2x12x8xf32> -> vector<2x12x8xf32>
    "tpu.trace_stop"() : () -> ()
    %c0_26 = arith.constant 0 : index
    %c0_27 = arith.constant 0 : index
    %44 = vector.load %arg7[%c0_26, %c0_27] : memref<1x8xf32, #tpu.memory_space<vmem>>, vector<1x8xf32>
    %45 = vector.shape_cast %44 : vector<1x8xf32> to vector<1x1x8xf32>
    %46 = vector.broadcast %45 : vector<1x1x8xf32> to vector<2x12x8xf32>
    %47 = arith.addf %43, %46 : vector<2x12x8xf32>
    %cst_28 = arith.constant 0.000000e+00 : f32
    %48 = vector.broadcast %cst_28 : f32 to vector<2x12x8xf32>
    %49 = arith.maximumf %47, %48 : vector<2x12x8xf32>
    %cst_29 = arith.constant dense<0xFF800000> : vector<2x8xf32>
    %50 = vector.multi_reduction <maximumf>, %49, %cst_29 [1] : vector<2x12x8xf32> to vector<2x8xf32>
    %c0_30 = arith.constant 0 : index
    %c0_31 = arith.constant 0 : index
    %51 = vector.load %arg13[%c0_30, %c0_31] : memref<8x128xf32, #tpu.memory_space<vmem>>, vector<8x128xf32>
    %cst_32 = arith.constant dense<0.000000e+00> : vector<2x128xf32>
    %52 = tpu.matmul %50, %51, %cst_32 {dimension_numbers = #tpu.dot_dimension_numbers<[1], [0], [0], [1], [0, 0, 1, 1], [], []>} : vector<2x8xf32>, vector<8x128xf32>, vector<2x128xf32> -> vector<2x128xf32>
    %53 = arith.addf %35, %52 : vector<2x128xf32>
    %c0_33 = arith.constant 0 : index
    %c0_34 = arith.constant 0 : index
    %c0_35 = arith.constant 0 : index
    %54 = vector.load %arg1[%c0_33, %c0_34, %c0_35] : memref<2x8x1xf32, #tpu.memory_space<vmem>>, vector<2x8x1xf32>
    %c0_36 = arith.constant 0 : index
    %c0_37 = arith.constant 0 : index
    %55 = vector.load %arg8[%c0_36, %c0_37] : memref<1x128xf32, #tpu.memory_space<vmem>>, vector<1x128xf32>
    %56 = vector.shape_cast %55 : vector<1x128xf32> to vector<1x1x128xf32>
    %57 = vector.broadcast %54 : vector<2x8x1xf32> to vector<2x8x128xf32>
    %58 = vector.broadcast %56 : vector<1x1x128xf32> to vector<2x8x128xf32>
    %59 = arith.mulf %57, %58 : vector<2x8x128xf32>
    %c0_38 = arith.constant 0 : index
    %c0_39 = arith.constant 0 : index
    %60 = vector.load %arg10[%c0_38, %c0_39] : memref<1x128xf32, #tpu.memory_space<vmem>>, vector<1x128xf32>
    %61 = vector.shape_cast %60 : vector<1x128xf32> to vector<1x1x128xf32>
    %62 = vector.broadcast %61 : vector<1x1x128xf32> to vector<2x8x128xf32>
    %63 = arith.addf %59, %62 : vector<2x8x128xf32>
    %c0_40 = arith.constant 0 : index
    %c0_41 = arith.constant 0 : index
    %64 = vector.load %arg9[%c0_40, %c0_41] : memref<32x128xf32, #tpu.memory_space<vmem>>, vector<32x128xf32>
    %cst_42 = arith.constant 0.000000e+00 : f32
    %65 = vector.broadcast %cst_42 : f32 to vector<2x32xf32>
    %cst_43 = arith.constant 0.000000e+00 : f32
    %66 = vector.broadcast %cst_43 : f32 to vector<2x32xf32>
    %67 = vector.extract_strided_slice %63 {offsets = [0, 0, 0], sizes = [2, 1, 128], strides = [1, 1, 1]} : vector<2x8x128xf32> to vector<2x1x128xf32>
    %68 = vector.shape_cast %67 : vector<2x1x128xf32> to vector<2x128xf32>
    %cst_44 = arith.constant dense<0.000000e+00> : vector<2x128xf32>
    %69 = tpu.matmul %65, %64, %cst_44 {dimension_numbers = #tpu.dot_dimension_numbers<[1], [0], [0], [1], [0, 0, 1, 1], [], []>} : vector<2x32xf32>, vector<32x128xf32>, vector<2x128xf32> -> vector<2x128xf32>
    %70 = arith.addf %68, %69 : vector<2x128xf32>
    %71 = arith.negf %70 : vector<2x128xf32>
    %72 = math.exp %71 : vector<2x128xf32>
    %cst_45 = arith.constant 1.000000e+00 : f32
    %73 = vector.broadcast %cst_45 : f32 to vector<2x128xf32>
    %74 = arith.addf %73, %72 : vector<2x128xf32>
    %75 = arith.divf %73, %74 : vector<2x128xf32>
    %76 = math.tanh %70 : vector<2x128xf32>
    %77 = vector.extract_strided_slice %75 {offsets = [0, 0], sizes = [2, 32], strides = [1, 1]} : vector<2x128xf32> to vector<2x32xf32>
    %78 = vector.extract_strided_slice %75 {offsets = [0, 32], sizes = [2, 32], strides = [1, 1]} : vector<2x128xf32> to vector<2x32xf32>
    %79 = vector.extract_strided_slice %76 {offsets = [0, 64], sizes = [2, 32], strides = [1, 1]} : vector<2x128xf32> to vector<2x32xf32>
    %80 = vector.extract_strided_slice %75 {offsets = [0, 96], sizes = [2, 32], strides = [1, 1]} : vector<2x128xf32> to vector<2x32xf32>
    %81 = arith.mulf %78, %66 : vector<2x32xf32>
    %82 = arith.mulf %77, %79 : vector<2x32xf32>
    %83 = arith.addf %81, %82 : vector<2x32xf32>
    %84 = math.tanh %83 : vector<2x32xf32>
    %85 = arith.mulf %80, %84 : vector<2x32xf32>
    %86 = vector.extract_strided_slice %63 {offsets = [0, 1, 0], sizes = [2, 1, 128], strides = [1, 1, 1]} : vector<2x8x128xf32> to vector<2x1x128xf32>
    %87 = vector.shape_cast %86 : vector<2x1x128xf32> to vector<2x128xf32>
    %cst_46 = arith.constant dense<0.000000e+00> : vector<2x128xf32>
    %88 = tpu.matmul %85, %64, %cst_46 {dimension_numbers = #tpu.dot_dimension_numbers<[1], [0], [0], [1], [0, 0, 1, 1], [], []>} : vector<2x32xf32>, vector<32x128xf32>, vector<2x128xf32> -> vector<2x128xf32>
    %89 = arith.addf %87, %88 : vector<2x128xf32>
    %90 = arith.negf %89 : vector<2x128xf32>
    %91 = math.exp %90 : vector<2x128xf32>
    %cst_47 = arith.constant 1.000000e+00 : f32
    %92 = vector.broadcast %cst_47 : f32 to vector<2x128xf32>
    %93 = arith.addf %92, %91 : vector<2x128xf32>
    %94 = arith.divf %92, %93 : vector<2x128xf32>
    %95 = math.tanh %89 : vector<2x128xf32>
    %96 = vector.extract_strided_slice %94 {offsets = [0, 0], sizes = [2, 32], strides = [1, 1]} : vector<2x128xf32> to vector<2x32xf32>
    %97 = vector.extract_strided_slice %94 {offsets = [0, 32], sizes = [2, 32], strides = [1, 1]} : vector<2x128xf32> to vector<2x32xf32>
    %98 = vector.extract_strided_slice %95 {offsets = [0, 64], sizes = [2, 32], strides = [1, 1]} : vector<2x128xf32> to vector<2x32xf32>
    %99 = vector.extract_strided_slice %94 {offsets = [0, 96], sizes = [2, 32], strides = [1, 1]} : vector<2x128xf32> to vector<2x32xf32>
    %100 = arith.mulf %97, %83 : vector<2x32xf32>
    %101 = arith.mulf %96, %98 : vector<2x32xf32>
    %102 = arith.addf %100, %101 : vector<2x32xf32>
    %103 = math.tanh %102 : vector<2x32xf32>
    %104 = arith.mulf %99, %103 : vector<2x32xf32>
    %105 = vector.extract_strided_slice %63 {offsets = [0, 2, 0], sizes = [2, 1, 128], strides = [1, 1, 1]} : vector<2x8x128xf32> to vector<2x1x128xf32>
    %106 = vector.shape_cast %105 : vector<2x1x128xf32> to vector<2x128xf32>
    %cst_48 = arith.constant dense<0.000000e+00> : vector<2x128xf32>
    %107 = tpu.matmul %104, %64, %cst_48 {dimension_numbers = #tpu.dot_dimension_numbers<[1], [0], [0], [1], [0, 0, 1, 1], [], []>} : vector<2x32xf32>, vector<32x128xf32>, vector<2x128xf32> -> vector<2x128xf32>
    %108 = arith.addf %106, %107 : vector<2x128xf32>
    %109 = arith.negf %108 : vector<2x128xf32>
    %110 = math.exp %109 : vector<2x128xf32>
    %cst_49 = arith.constant 1.000000e+00 : f32
    %111 = vector.broadcast %cst_49 : f32 to vector<2x128xf32>
    %112 = arith.addf %111, %110 : vector<2x128xf32>
    %113 = arith.divf %111, %112 : vector<2x128xf32>
    %114 = math.tanh %108 : vector<2x128xf32>
    %115 = vector.extract_strided_slice %113 {offsets = [0, 0], sizes = [2, 32], strides = [1, 1]} : vector<2x128xf32> to vector<2x32xf32>
    %116 = vector.extract_strided_slice %113 {offsets = [0, 32], sizes = [2, 32], strides = [1, 1]} : vector<2x128xf32> to vector<2x32xf32>
    %117 = vector.extract_strided_slice %114 {offsets = [0, 64], sizes = [2, 32], strides = [1, 1]} : vector<2x128xf32> to vector<2x32xf32>
    %118 = vector.extract_strided_slice %113 {offsets = [0, 96], sizes = [2, 32], strides = [1, 1]} : vector<2x128xf32> to vector<2x32xf32>
    %119 = arith.mulf %116, %102 : vector<2x32xf32>
    %120 = arith.mulf %115, %117 : vector<2x32xf32>
    %121 = arith.addf %119, %120 : vector<2x32xf32>
    %122 = math.tanh %121 : vector<2x32xf32>
    %123 = arith.mulf %118, %122 : vector<2x32xf32>
    %124 = vector.extract_strided_slice %63 {offsets = [0, 3, 0], sizes = [2, 1, 128], strides = [1, 1, 1]} : vector<2x8x128xf32> to vector<2x1x128xf32>
    %125 = vector.shape_cast %124 : vector<2x1x128xf32> to vector<2x128xf32>
    %cst_50 = arith.constant dense<0.000000e+00> : vector<2x128xf32>
    %126 = tpu.matmul %123, %64, %cst_50 {dimension_numbers = #tpu.dot_dimension_numbers<[1], [0], [0], [1], [0, 0, 1, 1], [], []>} : vector<2x32xf32>, vector<32x128xf32>, vector<2x128xf32> -> vector<2x128xf32>
    %127 = arith.addf %125, %126 : vector<2x128xf32>
    %128 = arith.negf %127 : vector<2x128xf32>
    %129 = math.exp %128 : vector<2x128xf32>
    %cst_51 = arith.constant 1.000000e+00 : f32
    %130 = vector.broadcast %cst_51 : f32 to vector<2x128xf32>
    %131 = arith.addf %130, %129 : vector<2x128xf32>
    %132 = arith.divf %130, %131 : vector<2x128xf32>
    %133 = math.tanh %127 : vector<2x128xf32>
    %134 = vector.extract_strided_slice %132 {offsets = [0, 0], sizes = [2, 32], strides = [1, 1]} : vector<2x128xf32> to vector<2x32xf32>
    %135 = vector.extract_strided_slice %132 {offsets = [0, 32], sizes = [2, 32], strides = [1, 1]} : vector<2x128xf32> to vector<2x32xf32>
    %136 = vector.extract_strided_slice %133 {offsets = [0, 64], sizes = [2, 32], strides = [1, 1]} : vector<2x128xf32> to vector<2x32xf32>
    %137 = vector.extract_strided_slice %132 {offsets = [0, 96], sizes = [2, 32], strides = [1, 1]} : vector<2x128xf32> to vector<2x32xf32>
    %138 = arith.mulf %135, %121 : vector<2x32xf32>
    %139 = arith.mulf %134, %136 : vector<2x32xf32>
    %140 = arith.addf %138, %139 : vector<2x32xf32>
    %141 = math.tanh %140 : vector<2x32xf32>
    %142 = arith.mulf %137, %141 : vector<2x32xf32>
    %143 = vector.extract_strided_slice %63 {offsets = [0, 4, 0], sizes = [2, 1, 128], strides = [1, 1, 1]} : vector<2x8x128xf32> to vector<2x1x128xf32>
    %144 = vector.shape_cast %143 : vector<2x1x128xf32> to vector<2x128xf32>
    %cst_52 = arith.constant dense<0.000000e+00> : vector<2x128xf32>
    %145 = tpu.matmul %142, %64, %cst_52 {dimension_numbers = #tpu.dot_dimension_numbers<[1], [0], [0], [1], [0, 0, 1, 1], [], []>} : vector<2x32xf32>, vector<32x128xf32>, vector<2x128xf32> -> vector<2x128xf32>
    %146 = arith.addf %144, %145 : vector<2x128xf32>
    %147 = arith.negf %146 : vector<2x128xf32>
    %148 = math.exp %147 : vector<2x128xf32>
    %cst_53 = arith.constant 1.000000e+00 : f32
    %149 = vector.broadcast %cst_53 : f32 to vector<2x128xf32>
    %150 = arith.addf %149, %148 : vector<2x128xf32>
    %151 = arith.divf %149, %150 : vector<2x128xf32>
    %152 = math.tanh %146 : vector<2x128xf32>
    %153 = vector.extract_strided_slice %151 {offsets = [0, 0], sizes = [2, 32], strides = [1, 1]} : vector<2x128xf32> to vector<2x32xf32>
    %154 = vector.extract_strided_slice %151 {offsets = [0, 32], sizes = [2, 32], strides = [1, 1]} : vector<2x128xf32> to vector<2x32xf32>
    %155 = vector.extract_strided_slice %152 {offsets = [0, 64], sizes = [2, 32], strides = [1, 1]} : vector<2x128xf32> to vector<2x32xf32>
    %156 = vector.extract_strided_slice %151 {offsets = [0, 96], sizes = [2, 32], strides = [1, 1]} : vector<2x128xf32> to vector<2x32xf32>
    %157 = arith.mulf %154, %140 : vector<2x32xf32>
    %158 = arith.mulf %153, %155 : vector<2x32xf32>
    %159 = arith.addf %157, %158 : vector<2x32xf32>
    %160 = math.tanh %159 : vector<2x32xf32>
    %161 = arith.mulf %156, %160 : vector<2x32xf32>
    %162 = vector.extract_strided_slice %63 {offsets = [0, 5, 0], sizes = [2, 1, 128], strides = [1, 1, 1]} : vector<2x8x128xf32> to vector<2x1x128xf32>
    %163 = vector.shape_cast %162 : vector<2x1x128xf32> to vector<2x128xf32>
    %cst_54 = arith.constant dense<0.000000e+00> : vector<2x128xf32>
    %164 = tpu.matmul %161, %64, %cst_54 {dimension_numbers = #tpu.dot_dimension_numbers<[1], [0], [0], [1], [0, 0, 1, 1], [], []>} : vector<2x32xf32>, vector<32x128xf32>, vector<2x128xf32> -> vector<2x128xf32>
    %165 = arith.addf %163, %164 : vector<2x128xf32>
    %166 = arith.negf %165 : vector<2x128xf32>
    %167 = math.exp %166 : vector<2x128xf32>
    %cst_55 = arith.constant 1.000000e+00 : f32
    %168 = vector.broadcast %cst_55 : f32 to vector<2x128xf32>
    %169 = arith.addf %168, %167 : vector<2x128xf32>
    %170 = arith.divf %168, %169 : vector<2x128xf32>
    %171 = math.tanh %165 : vector<2x128xf32>
    %172 = vector.extract_strided_slice %170 {offsets = [0, 0], sizes = [2, 32], strides = [1, 1]} : vector<2x128xf32> to vector<2x32xf32>
    %173 = vector.extract_strided_slice %170 {offsets = [0, 32], sizes = [2, 32], strides = [1, 1]} : vector<2x128xf32> to vector<2x32xf32>
    %174 = vector.extract_strided_slice %171 {offsets = [0, 64], sizes = [2, 32], strides = [1, 1]} : vector<2x128xf32> to vector<2x32xf32>
    %175 = vector.extract_strided_slice %170 {offsets = [0, 96], sizes = [2, 32], strides = [1, 1]} : vector<2x128xf32> to vector<2x32xf32>
    %176 = arith.mulf %173, %159 : vector<2x32xf32>
    %177 = arith.mulf %172, %174 : vector<2x32xf32>
    %178 = arith.addf %176, %177 : vector<2x32xf32>
    %179 = math.tanh %178 : vector<2x32xf32>
    %180 = arith.mulf %175, %179 : vector<2x32xf32>
    %181 = vector.extract_strided_slice %63 {offsets = [0, 6, 0], sizes = [2, 1, 128], strides = [1, 1, 1]} : vector<2x8x128xf32> to vector<2x1x128xf32>
    %182 = vector.shape_cast %181 : vector<2x1x128xf32> to vector<2x128xf32>
    %cst_56 = arith.constant dense<0.000000e+00> : vector<2x128xf32>
    %183 = tpu.matmul %180, %64, %cst_56 {dimension_numbers = #tpu.dot_dimension_numbers<[1], [0], [0], [1], [0, 0, 1, 1], [], []>} : vector<2x32xf32>, vector<32x128xf32>, vector<2x128xf32> -> vector<2x128xf32>
    %184 = arith.addf %182, %183 : vector<2x128xf32>
    %185 = arith.negf %184 : vector<2x128xf32>
    %186 = math.exp %185 : vector<2x128xf32>
    %cst_57 = arith.constant 1.000000e+00 : f32
    %187 = vector.broadcast %cst_57 : f32 to vector<2x128xf32>
    %188 = arith.addf %187, %186 : vector<2x128xf32>
    %189 = arith.divf %187, %188 : vector<2x128xf32>
    %190 = math.tanh %184 : vector<2x128xf32>
    %191 = vector.extract_strided_slice %189 {offsets = [0, 0], sizes = [2, 32], strides = [1, 1]} : vector<2x128xf32> to vector<2x32xf32>
    %192 = vector.extract_strided_slice %189 {offsets = [0, 32], sizes = [2, 32], strides = [1, 1]} : vector<2x128xf32> to vector<2x32xf32>
    %193 = vector.extract_strided_slice %190 {offsets = [0, 64], sizes = [2, 32], strides = [1, 1]} : vector<2x128xf32> to vector<2x32xf32>
    %194 = vector.extract_strided_slice %189 {offsets = [0, 96], sizes = [2, 32], strides = [1, 1]} : vector<2x128xf32> to vector<2x32xf32>
    %195 = arith.mulf %192, %178 : vector<2x32xf32>
    %196 = arith.mulf %191, %193 : vector<2x32xf32>
    %197 = arith.addf %195, %196 : vector<2x32xf32>
    %198 = math.tanh %197 : vector<2x32xf32>
    %199 = arith.mulf %194, %198 : vector<2x32xf32>
    %200 = vector.extract_strided_slice %63 {offsets = [0, 7, 0], sizes = [2, 1, 128], strides = [1, 1, 1]} : vector<2x8x128xf32> to vector<2x1x128xf32>
    %201 = vector.shape_cast %200 : vector<2x1x128xf32> to vector<2x128xf32>
    %cst_58 = arith.constant dense<0.000000e+00> : vector<2x128xf32>
    %202 = tpu.matmul %199, %64, %cst_58 {dimension_numbers = #tpu.dot_dimension_numbers<[1], [0], [0], [1], [0, 0, 1, 1], [], []>} : vector<2x32xf32>, vector<32x128xf32>, vector<2x128xf32> -> vector<2x128xf32>
    %203 = arith.addf %201, %202 : vector<2x128xf32>
    %204 = arith.negf %203 : vector<2x128xf32>
    %205 = math.exp %204 : vector<2x128xf32>
    %cst_59 = arith.constant 1.000000e+00 : f32
    %206 = vector.broadcast %cst_59 : f32 to vector<2x128xf32>
    %207 = arith.addf %206, %205 : vector<2x128xf32>
    %208 = arith.divf %206, %207 : vector<2x128xf32>
    %209 = math.tanh %203 : vector<2x128xf32>
    %210 = vector.extract_strided_slice %208 {offsets = [0, 0], sizes = [2, 32], strides = [1, 1]} : vector<2x128xf32> to vector<2x32xf32>
    %211 = vector.extract_strided_slice %208 {offsets = [0, 32], sizes = [2, 32], strides = [1, 1]} : vector<2x128xf32> to vector<2x32xf32>
    %212 = vector.extract_strided_slice %209 {offsets = [0, 64], sizes = [2, 32], strides = [1, 1]} : vector<2x128xf32> to vector<2x32xf32>
    %213 = vector.extract_strided_slice %208 {offsets = [0, 96], sizes = [2, 32], strides = [1, 1]} : vector<2x128xf32> to vector<2x32xf32>
    %214 = arith.mulf %211, %197 : vector<2x32xf32>
    %215 = arith.mulf %210, %212 : vector<2x32xf32>
    %216 = arith.addf %214, %215 : vector<2x32xf32>
    %217 = math.tanh %216 : vector<2x32xf32>
    %218 = arith.mulf %213, %217 : vector<2x32xf32>
    %c0_60 = arith.constant 0 : index
    %c0_61 = arith.constant 0 : index
    %219 = vector.load %arg14[%c0_60, %c0_61] : memref<32x128xf32, #tpu.memory_space<vmem>>, vector<32x128xf32>
    %cst_62 = arith.constant dense<0.000000e+00> : vector<2x128xf32>
    %220 = tpu.matmul %218, %219, %cst_62 {dimension_numbers = #tpu.dot_dimension_numbers<[1], [0], [0], [1], [0, 0, 1, 1], [], []>} : vector<2x32xf32>, vector<32x128xf32>, vector<2x128xf32> -> vector<2x128xf32>
    %221 = arith.addf %53, %220 : vector<2x128xf32>
    %cst_63 = arith.constant dense<0xFF800000> : vector<2xf32>
    %222 = vector.multi_reduction <maximumf>, %221, %cst_63 [1] : vector<2x128xf32> to vector<2xf32>
    %223 = vector.shape_cast %222 : vector<2xf32> to vector<2x1xf32>
    %224 = vector.broadcast %223 : vector<2x1xf32> to vector<2x128xf32>
    %225 = arith.subf %221, %224 : vector<2x128xf32>
    %226 = math.exp %225 : vector<2x128xf32>
    %cst_64 = arith.constant dense<0.000000e+00> : vector<2xf32>
    %227 = vector.multi_reduction <add>, %226, %cst_64 [1] : vector<2x128xf32> to vector<2xf32>
    %228 = vector.shape_cast %227 : vector<2xf32> to vector<2x1xf32>
    %229 = math.log %228 : vector<2x1xf32>
    %230 = vector.broadcast %229 : vector<2x1xf32> to vector<2x128xf32>
    %231 = arith.subf %225, %230 : vector<2x128xf32>
    %c0_65 = arith.constant 0 : index
    %c0_66 = arith.constant 0 : index
    %232 = vector.load %arg16[%c0_65, %c0_66] : memref<2x128xf32, #tpu.memory_space<vmem>>, vector<2x128xf32>
    tpu.vector_store %arg16[%c0_65, %c0_66], %231 {strides = array<i32>} : memref<2x128xf32, #tpu.memory_space<vmem>>, vector<2x128xf32>,
    return
  }
}

</mosaic_0001>

<llo_original>
// kernel: fwd.1
$region0: #{fwd.1}
  #allocation0 [shape = 'u32[]', space=smem, size = 0x4, offset = 0x4, fixed_abs, tag = 'smem constant byte address 0x4 - core index']
  #allocation1 [shape = 'u32[72,128]{1,0:T(1,128)}', space=vmem, size = 0x9000, scoped, tag = 'internal scratch']
  %s0 = inlined_call_operand.hbm [shape: f32[2,16,128], index: 0, kind: input, shape index: {}]
  %s1 = inlined_call_operand.vmem [shape: f32[2,8,1], index: 1, kind: input, shape index: {}]
  %s2 = inlined_call_operand.hbm [shape: f32[384,8], index: 2, kind: input, shape index: {}]
  %s3 = inlined_call_operand.hbm [shape: f32[512,8], index: 3, kind: input, shape index: {}]
  %s4 = inlined_call_operand.hbm [shape: f32[640,8], index: 4, kind: input, shape index: {}]
  %s5 = inlined_call_operand.hbm [shape: f32[1,8], index: 5, kind: input, shape index: {}]
  %s6 = inlined_call_operand.hbm [shape: f32[1,8], index: 6, kind: input, shape index: {}]
  %s7 = inlined_call_operand.hbm [shape: f32[1,8], index: 7, kind: input, shape index: {}]
  %s8 = inlined_call_operand.hbm [shape: f32[1,128], index: 8, kind: input, shape index: {}]
  %s9 = inlined_call_operand.hbm [shape: f32[32,128], index: 9, kind: input, shape index: {}]
  %s10 = inlined_call_operand.vmem [shape: f32[1,128], index: 10, kind: input, shape index: {}]
  %s11 = inlined_call_operand.vmem [shape: f32[8,128], index: 11, kind: input, shape index: {}]
  %s12 = inlined_call_operand.vmem [shape: f32[8,128], index: 12, kind: input, shape index: {}]
  %s13 = inlined_call_operand.vmem [shape: f32[8,128], index: 13, kind: input, shape index: {}]
  %s14 = inlined_call_operand.hbm [shape: f32[32,128], index: 14, kind: input, shape index: {}]
  %s15 = inlined_call_operand.vmem [shape: f32[1,128], index: 15, kind: input, shape index: {}]
  %s16 = inlined_call_operand.hbm [shape: f32[2,128], index: 16, kind: output, shape index: {}]
  %s17 = sld [smem:[#allocation0]]
  $region114: #{fwd.1} parent=0
    _
  %s19 = ssub.s32 1, %s17
  %s20 = scalar_select 0, %s19, %s17
  $region1: #{fwd.1} parent=0
    #allocation2 [shape = 'u8[16384]{0}', space=vmem, size = 0x4000, scoped, tag = 'input window, operand 0, single buffered']
    #allocation3 [shape = 's32[1]{0}', space=sflag, size = 0x4, scoped, tag = 'scoped memory for fwd.1']
    #allocation4 [shape = 's32[1]{0}', space=sflag, size = 0x4, scoped, tag = 'scoped memory for fwd.1']
    #allocation5 [shape = 'u8[196608]{0}', space=vmem, size = 0x30000, scoped, tag = 'input window, operand 2, single buffered']
    #allocation6 [shape = 's32[1]{0}', space=sflag, size = 0x4, scoped, tag = 'scoped memory for fwd.1']
    #allocation7 [shape = 'u8[262144]{0}', space=vmem, size = 0x40000, scoped, tag = 'input window, operand 3, single buffered']
    #allocation8 [shape = 'u8[327680]{0}', space=vmem, size = 0x50000, scoped, tag = 'input window, operand 4, single buffered']
    #allocation9 [shape = 's32[1]{0}', space=sflag, size = 0x4, scoped, tag = 'scoped memory for fwd.1']
    #allocation10 [shape = 'u8[512]{0}', space=vmem, size = 0x400, scoped, tag = 'input window, operand 5, single buffered']
    #allocation11 [shape = 'u8[512]{0}', space=vmem, size = 0x400, scoped, tag = 'input window, operand 6, single buffered']
    #allocation12 [shape = 's32[1]{0}', space=sflag, size = 0x4, scoped, tag = 'scoped memory for fwd.1']
    #allocation13 [shape = 'u8[512]{0}', space=vmem, size = 0x400, scoped, tag = 'input window, operand 7, single buffered']
    #allocation14 [shape = 'u8[512]{0}', space=vmem, size = 0x400, scoped, tag = 'input window, operand 8, single buffered']
    #allocation15 [shape = 's32[1]{0}', space=sflag, size = 0x4, scoped, tag = 'scoped memory for fwd.1']
    #allocation16 [shape = 'u8[16384]{0}', space=vmem, size = 0x4000, scoped, tag = 'input window, operand 9, single buffered']
    #allocation17 [shape = 'u8[16384]{0}', space=vmem, size = 0x4000, scoped, tag = 'input window, operand 14, single buffered']
    #allocation18 [shape = 's32[1]{0}', space=sflag, size = 0x4, scoped, tag = 'scoped memory for fwd.1']
    #allocation19 [shape = 'u8[1024]{0}', space=vmem, size = 0x400, scoped, tag = 'output window, operand 0, single buffered']
    %21 = vsyncpa [#allocation3], 0
    %22 = vsyncpa [#allocation6], 0
    %23 = vsyncpa [#allocation9], 0
    %24 = vsyncpa [#allocation12], 0
    %25 = vsyncpa [#allocation15], 0
    %26 = vsyncpa [#allocation18], 0
    %27 = vsyncpa [#allocation4], 0
    // Predicated region
    $region2: #{fwd.1} parent=1 // pred_check
      _
    $region3: #{fwd.1} parent=1 // pred_check_branch
      %29 = sbr.rel (0) target = $region5
    $region4: #{fwd.1} parent=1 // pred_region
      %31 = vsyncadd [#allocation3], 0
      %s32 = sshll.u32 %s0, 4
      %s33 = int_to_ptr.hbm [resolvable:$true] %s32
      %s34 = sshll.u32 [#allocation2], 4
      %s35 = int_to_ptr.vmem [resolvable:$true] %s34
      %40 = dma.hbm_to_vmem [thread:$0]  %s33, 512, %s35, [#allocation3], 128, 128, 8
    $region5: #{fwd.1} parent=1 // pred_fallthru
      _
    // Predicated region
    $region6: #{fwd.1} parent=1 // pred_check
      _
    $region7: #{fwd.1} parent=1 // pred_check_branch
      %42 = sbr.rel (0) target = $region9
    $region8: #{fwd.1} parent=1 // pred_region
      _
    $region9: #{fwd.1} parent=1 // pred_fallthru
      _
    // Predicated region
    $region10: #{fwd.1} parent=1 // pred_check
      _
    $region11: #{fwd.1} parent=1 // pred_check_branch
      %44 = sbr.rel (0) target = $region13
    $region12: #{fwd.1} parent=1 // pred_region
      %46 = vsyncadd [#allocation6], 0
      %s47 = sshll.u32 %s2, 4
      %s48 = int_to_ptr.hbm [resolvable:$true] %s47
      %s49 = sshll.u32 [#allocation5], 4
      %s50 = int_to_ptr.vmem [resolvable:$true] %s49
      %55 = dma.hbm_to_vmem [thread:$0]  %s48, 6144, %s50, [#allocation6], 128, 128, 8
    $region13: #{fwd.1} parent=1 // pred_fallthru
      _
    // Predicated region
    $region14: #{fwd.1} parent=1 // pred_check
      _
    $region15: #{fwd.1} parent=1 // pred_check_branch
      %57 = sbr.rel (0) target = $region17
    $region16: #{fwd.1} parent=1 // pred_region
      %59 = vsyncadd [#allocation6], 0
      %s60 = sshll.u32 %s3, 4
      %s61 = int_to_ptr.hbm [resolvable:$true] %s60
      %s62 = sshll.u32 [#allocation7], 4
      %s63 = int_to_ptr.vmem [resolvable:$true] %s62
      %68 = dma.hbm_to_vmem [thread:$0]  %s61, 8192, %s63, [#allocation6], 128, 128, 8
    $region17: #{fwd.1} parent=1 // pred_fallthru
      _
    // Predicated region
    $region18: #{fwd.1} parent=1 // pred_check
      _
    $region19: #{fwd.1} parent=1 // pred_check_branch
      %70 = sbr.rel (0) target = $region21
    $region20: #{fwd.1} parent=1 // pred_region
      %72 = vsyncadd [#allocation9], 0
      %s73 = sshll.u32 %s4, 4
      %s74 = int_to_ptr.hbm [resolvable:$true] %s73
      %s75 = sshll.u32 [#allocation8], 4
      %s76 = int_to_ptr.vmem [resolvable:$true] %s75
      %81 = dma.hbm_to_vmem [thread:$0]  %s74, 10240, %s76, [#allocation9], 128, 128, 8
    $region21: #{fwd.1} parent=1 // pred_fallthru
      _
    // Predicated region
    $region22: #{fwd.1} parent=1 // pred_check
      _
    $region23: #{fwd.1} parent=1 // pred_check_branch
      %83 = sbr.rel (0) target = $region25
    $region24: #{fwd.1} parent=1 // pred_region
      %85 = vsyncadd [#allocation9], 0
      %s87 = sshll.u32 %s5, 4
      %s88 = int_to_ptr.hbm [resolvable:$true] %s87
      %s89 = sshll.u32 [#allocation10], 4
      %s90 = int_to_ptr.vmem [resolvable:$true] %s89
      %92 = dma.hbm_to_vmem [thread:$0]  %s88, 16, %s90, [#allocation9]
    $region25: #{fwd.1} parent=1 // pred_fallthru
      _
    // Predicated region
    $region26: #{fwd.1} parent=1 // pred_check
      _
    $region27: #{fwd.1} parent=1 // pred_check_branch
      %94 = sbr.rel (0) target = $region29
    $region28: #{fwd.1} parent=1 // pred_region
      %96 = vsyncadd [#allocation12], 0
      %s98 = sshll.u32 %s6, 4
      %s99 = int_to_ptr.hbm [resolvable:$true] %s98
      %s100 = sshll.u32 [#allocation11], 4
      %s101 = int_to_ptr.vmem [resolvable:$true] %s100
      %103 = dma.hbm_to_vmem [thread:$0]  %s99, 16, %s101, [#allocation12]
    $region29: #{fwd.1} parent=1 // pred_fallthru
      _
    // Predicated region
    $region30: #{fwd.1} parent=1 // pred_check
      _
    $region31: #{fwd.1} parent=1 // pred_check_branch
      %105 = sbr.rel (0) target = $region33
    $region32: #{fwd.1} parent=1 // pred_region
      %107 = vsyncadd [#allocation12], 0
      %s109 = sshll.u32 %s7, 4
      %s110 = int_to_ptr.hbm [resolvable:$true] %s109
      %s111 = sshll.u32 [#allocation13], 4
      %s112 = int_to_ptr.vmem [resolvable:$true] %s111
      %114 = dma.hbm_to_vmem [thread:$0]  %s110, 16, %s112, [#allocation12]
    $region33: #{fwd.1} parent=1 // pred_fallthru
      _
    // Predicated region
    $region34: #{fwd.1} parent=1 // pred_check
      _
    $region35: #{fwd.1} parent=1 // pred_check_branch
      %116 = sbr.rel (0) target = $region37
    $region36: #{fwd.1} parent=1 // pred_region
      %118 = vsyncadd [#allocation15], 0
      %s120 = sshll.u32 %s8, 4
      %s121 = int_to_ptr.hbm [resolvable:$true] %s120
      %s122 = sshll.u32 [#allocation14], 4
      %s123 = int_to_ptr.vmem [resolvable:$true] %s122
      %125 = dma.hbm_to_vmem [thread:$0]  %s121, 16, %s123, [#allocation15]
    $region37: #{fwd.1} parent=1 // pred_fallthru
      _
    // Predicated region
    $region38: #{fwd.1} parent=1 // pred_check
      _
    $region39: #{fwd.1} parent=1 // pred_check_branch
      %127 = sbr.rel (0) target = $region41
    $region40: #{fwd.1} parent=1 // pred_region
      %129 = vsyncadd [#allocation15], 0
      %s130 = sshll.u32 %s9, 4
      %s131 = int_to_ptr.hbm [resolvable:$true] %s130
      %s132 = sshll.u32 [#allocation16], 4
      %s133 = int_to_ptr.vmem [resolvable:$true] %s132
      %138 = dma.hbm_to_vmem [thread:$0]  %s131, 512, %s133, [#allocation15], 128, 128, 8
    $region41: #{fwd.1} parent=1 // pred_fallthru
      _
    // Predicated region
    $region42: #{fwd.1} parent=1 // pred_check
      _
    $region43: #{fwd.1} parent=1 // pred_check_branch
      %140 = sbr.rel (0) target = $region45
    $region44: #{fwd.1} parent=1 // pred_region
      _
    $region45: #{fwd.1} parent=1 // pred_fallthru
      _
    // Predicated region
    $region46: #{fwd.1} parent=1 // pred_check
      _
    $region47: #{fwd.1} parent=1 // pred_check_branch
      %142 = sbr.rel (0) target = $region49
    $region48: #{fwd.1} parent=1 // pred_region
      _
    $region49: #{fwd.1} parent=1 // pred_fallthru
      _
    // Predicated region
    $region50: #{fwd.1} parent=1 // pred_check
      _
    $region51: #{fwd.1} parent=1 // pred_check_branch
      %144 = sbr.rel (0) target = $region53
    $region52: #{fwd.1} parent=1 // pred_region
      _
    $region53: #{fwd.1} parent=1 // pred_fallthru
      _
    // Predicated region
    $region54: #{fwd.1} parent=1 // pred_check
      _
    $region55: #{fwd.1} parent=1 // pred_check_branch
      %146 = sbr.rel (0) target = $region57
    $region56: #{fwd.1} parent=1 // pred_region
      _
    $region57: #{fwd.1} parent=1 // pred_fallthru
      _
    // Predicated region
    $region58: #{fwd.1} parent=1 // pred_check
      _
    $region59: #{fwd.1} parent=1 // pred_check_branch
      %148 = sbr.rel (0) target = $region61
    $region60: #{fwd.1} parent=1 // pred_region
      %150 = vsyncadd [#allocation18], 0
      %s151 = sshll.u32 %s14, 4
      %s152 = int_to_ptr.hbm [resolvable:$true] %s151
      %s153 = sshll.u32 [#allocation17], 4
      %s154 = int_to_ptr.vmem [resolvable:$true] %s153
      %159 = dma.hbm_to_vmem [thread:$0]  %s152, 512, %s154, [#allocation18], 128, 128, 8
    $region61: #{fwd.1} parent=1 // pred_fallthru
      _
    // Predicated region
    $region62: #{fwd.1} parent=1 // pred_check
      _
    $region63: #{fwd.1} parent=1 // pred_check_branch
      %161 = sbr.rel (0) target = $region65
    $region64: #{fwd.1} parent=1 // pred_region
      _
    $region65: #{fwd.1} parent=1 // pred_fallthru
      _
    // Predicated region
    $region66: #{fwd.1} parent=1 // pred_check
      _
    $region67: #{fwd.1} parent=1 // pred_check_branch
      %163 = sbr.rel (0) target = $region69
    $region68: #{fwd.1} parent=1 // pred_region
      %165 = dma.done [#allocation3], 512
    $region69: #{fwd.1} parent=1 // pred_fallthru
      _
    // Predicated region
    $region70: #{fwd.1} parent=1 // pred_check
      _
    $region71: #{fwd.1} parent=1 // pred_check_branch
      %167 = sbr.rel (0) target = $region73
    $region72: #{fwd.1} parent=1 // pred_region
      %169 = dma.done [#allocation6], 6144
    $region73: #{fwd.1} parent=1 // pred_fallthru
      _
    // Predicated region
    $region74: #{fwd.1} parent=1 // pred_check
      _
    $region75: #{fwd.1} parent=1 // pred_check_branch
      %171 = sbr.rel (0) target = $region77
    $region76: #{fwd.1} parent=1 // pred_region
      %173 = dma.done [#allocation6], 8192
    $region77: #{fwd.1} parent=1 // pred_fallthru
      _
    // Predicated region
    $region78: #{fwd.1} parent=1 // pred_check
      _
    $region79: #{fwd.1} parent=1 // pred_check_branch
      %175 = sbr.rel (0) target = $region81
    $region80: #{fwd.1} parent=1 // pred_region
      %177 = dma.done [#allocation9], 10240
    $region81: #{fwd.1} parent=1 // pred_fallthru
      _
    // Predicated region
    $region82: #{fwd.1} parent=1 // pred_check
      _
    $region83: #{fwd.1} parent=1 // pred_check_branch
      %179 = sbr.rel (0) target = $region85
    $region84: #{fwd.1} parent=1 // pred_region
      %181 = dma.done [#allocation9], 16
    $region85: #{fwd.1} parent=1 // pred_fallthru
      _
    // Predicated region
    $region86: #{fwd.1} parent=1 // pred_check
      _
    $region87: #{fwd.1} parent=1 // pred_check_branch
      %183 = sbr.rel (0) target = $region89
    $region88: #{fwd.1} parent=1 // pred_region
      %185 = dma.done [#allocation12], 16
    $region89: #{fwd.1} parent=1 // pred_fallthru
      _
    // Predicated region
    $region90: #{fwd.1} parent=1 // pred_check
      _
    $region91: #{fwd.1} parent=1 // pred_check_branch
      %187 = sbr.rel (0) target = $region93
    $region92: #{fwd.1} parent=1 // pred_region
      %189 = dma.done [#allocation12], 16
    $region93: #{fwd.1} parent=1 // pred_fallthru
      _
    // Predicated region
    $region94: #{fwd.1} parent=1 // pred_check
      _
    $region95: #{fwd.1} parent=1 // pred_check_branch
      %191 = sbr.rel (0) target = $region97
    $region96: #{fwd.1} parent=1 // pred_region
      %193 = dma.done [#allocation15], 16
    $region97: #{fwd.1} parent=1 // pred_fallthru
      _
    // Predicated region
    $region98: #{fwd.1} parent=1 // pred_check
      _
    $region99: #{fwd.1} parent=1 // pred_check_branch
      %195 = sbr.rel (0) target = $region101
    $region100: #{fwd.1} parent=1 // pred_region
      %197 = dma.done [#allocation15], 512
    $region101: #{fwd.1} parent=1 // pred_fallthru
      _
    // Predicated region
    $region102: #{fwd.1} parent=1 // pred_check
      _
    $region103: #{fwd.1} parent=1 // pred_check_branch
      %199 = sbr.rel (0) target = $region105
    $region104: #{fwd.1} parent=1 // pred_region
      %201 = dma.done [#allocation18], 512
    $region105: #{fwd.1} parent=1 // pred_fallthru
      _
    %v202 = vld [vmem:[#allocation2] sm:$0xff]
    %v203 = vld [vmem:[#allocation2 + $0x8] sm:$0xff]
    %v204 = vld [vmem:[#allocation2 + $0x10] sm:$0xff]
    %v205 = vld [vmem:[#allocation2 + $0x18] sm:$0xff]
    %v206 = vld [vmem:[%s15] sm:$0x1]
    %vm211 = vcmask 1046528
    %v212 = vrot.slane %v202, 1
    %v213 = vrot.slane %v203, 1
    %v214 = vsel %vm211, %v212, %v213
    %v215 = vrot.slane %v204, 1
    %v216 = vrot.slane %v205, 1
    %v217 = vsel %vm211, %v215, %v216
    %vm218 = vcmask 1045504
    %v219 = vrot.slane %v202, 2
    %v220 = vrot.slane %v203, 2
    %v221 = vsel %vm218, %v219, %v220
    %v222 = vrot.slane %v204, 2
    %v223 = vrot.slane %v205, 2
    %v224 = vsel %vm218, %v222, %v223
    %v225 = vld [vmem:[#allocation5] sm:$0xff]
    %v226 = vld [vmem:[#allocation5 + $0x8] sm:$0xff]
    %v227 = vld [vmem:[#allocation5 + $0x10] sm:$0xff]
    %v228 = vld [vmem:[#allocation5 + $0x18] sm:$0xff]
    %v229 = vld [vmem:[#allocation5 + $0x20] sm:$0xff]
    %v230 = vld [vmem:[#allocation5 + $0x28] sm:$0xff]
    %v231 = vld [vmem:[#allocation5 + $0x30] sm:$0xff]
    %v232 = vld [vmem:[#allocation5 + $0x38] sm:$0xff]
    %v233 = vld [vmem:[#allocation5 + $0x40] sm:$0xff]
    %v234 = vld [vmem:[#allocation5 + $0x48] sm:$0xff]
    %v235 = vld [vmem:[#allocation5 + $0x50] sm:$0xff]
    %v236 = vld [vmem:[#allocation5 + $0x58] sm:$0xff]
    %v237 = vld [vmem:[#allocation5 + $0x60] sm:$0xff]
    %v238 = vld [vmem:[#allocation5 + $0x68] sm:$0xff]
    %v239 = vld [vmem:[#allocation5 + $0x70] sm:$0xff]
    %v240 = vld [vmem:[#allocation5 + $0x78] sm:$0xff]
    %v241 = vld [vmem:[#allocation5 + $0x80] sm:$0xff]
    %v242 = vld [vmem:[#allocation5 + $0x88] sm:$0xff]
    %v243 = vld [vmem:[#allocation5 + $0x90] sm:$0xff]
    %v244 = vld [vmem:[#allocation5 + $0x98] sm:$0xff]
    %v245 = vld [vmem:[#allocation5 + $0xa0] sm:$0xff]
    %v246 = vld [vmem:[#allocation5 + $0xa8] sm:$0xff]
    %v247 = vld [vmem:[#allocation5 + $0xb0] sm:$0xff]
    %v248 = vld [vmem:[#allocation5 + $0xb8] sm:$0xff]
    %v249 = vld [vmem:[#allocation5 + $0xc0] sm:$0xff]
    %v250 = vld [vmem:[#allocation5 + $0xc8] sm:$0xff]
    %v251 = vld [vmem:[#allocation5 + $0xd0] sm:$0xff]
    %v252 = vld [vmem:[#allocation5 + $0xd8] sm:$0xff]
    %v253 = vld [vmem:[#allocation5 + $0xe0] sm:$0xff]
    %v254 = vld [vmem:[#allocation5 + $0xe8] sm:$0xff]
    %v255 = vld [vmem:[#allocation5 + $0xf0] sm:$0xff]
    %v256 = vld [vmem:[#allocation5 + $0xf8] sm:$0xff]
    %v257 = vld [vmem:[#allocation5 + $0x100] sm:$0xff]
    %v258 = vld [vmem:[#allocation5 + $0x108] sm:$0xff]
    %v259 = vld [vmem:[#allocation5 + $0x110] sm:$0xff]
    %v260 = vld [vmem:[#allocation5 + $0x118] sm:$0xff]
    %v261 = vld [vmem:[#allocation5 + $0x120] sm:$0xff]
    %v262 = vld [vmem:[#allocation5 + $0x128] sm:$0xff]
    %v263 = vld [vmem:[#allocation5 + $0x130] sm:$0xff]
    %v264 = vld [vmem:[#allocation5 + $0x138] sm:$0xff]
    %v265 = vld [vmem:[#allocation5 + $0x140] sm:$0xff]
    %v266 = vld [vmem:[#allocation5 + $0x148] sm:$0xff]
    %v267 = vld [vmem:[#allocation5 + $0x150] sm:$0xff]
    %v268 = vld [vmem:[#allocation5 + $0x158] sm:$0xff]
    %v269 = vld [vmem:[#allocation5 + $0x160] sm:$0xff]
    %v270 = vld [vmem:[#allocation5 + $0x168] sm:$0xff]
    %v271 = vld [vmem:[#allocation5 + $0x170] sm:$0xff]
    %v272 = vld [vmem:[#allocation5 + $0x178] sm:$0xff]
    %v273 = vld [vmem:[#allocation10] sm:$0x1]
    %v275 = vperm.slane %v273, 0
    %v276 = vrot.slane %v214, 6
    %v277 = vrot.slane %v221, 4
    %v278 = vrot.slane %v213, 6
    %v279 = vrot.slane %v220, 4
    %v280 = vrot.slane %v217, 6
    %v281 = vrot.slane %v224, 4
    %v282 = vrot.slane %v216, 6
    %v283 = vrot.slane %v223, 4
    %vm284 = vcmask 1041408
    %v285 = vsel %vm284, %v202, %v276
    %vm286 = vcmask 1043456
    %v287 = vsel %vm286, %v285, %v277
    %vm288 = vcmask 1043458
    %v289 = vsel %vm288, %v202, %v276
    %vm290 = vcmask 1045506
    %v291 = vsel %vm290, %v289, %v277
    %v292 = vrot.slane %v291, 2
    %vm293 = vcmask 1045508
    %v294 = vsel %vm293, %v202, %v276
    %v295 = vsel %vm286, %v277, %v294
    %v296 = vrot.slane %v295, 4
    %v297 = vsel %vm218, %v276, %v202
    %v298 = vsel %vm290, %v277, %v297
    %v299 = vrot.slane %v298, 6
    %v300 = vsel %vm284, %v203, %v278
    %v301 = vsel %vm286, %v300, %v279
    %v302 = vsel %vm288, %v203, %v278
    %v303 = vsel %vm290, %v302, %v279
    %v304 = vrot.slane %v303, 2
    %v305 = vsel %vm293, %v203, %v278
    %v306 = vsel %vm286, %v279, %v305
    %v307 = vrot.slane %v306, 4
    %v308 = vsel %vm284, %v204, %v280
    %v309 = vsel %vm286, %v308, %v281
    %v310 = vsel %vm288, %v204, %v280
    %v311 = vsel %vm290, %v310, %v281
    %v312 = vrot.slane %v311, 2
    %v313 = vsel %vm293, %v204, %v280
    %v314 = vsel %vm286, %v281, %v313
    %v315 = vrot.slane %v314, 4
    %v316 = vsel %vm218, %v280, %v204
    %v317 = vsel %vm290, %v281, %v316
    %v318 = vrot.slane %v317, 6
    %v319 = vsel %vm284, %v205, %v282
    %v320 = vsel %vm286, %v319, %v283
    %v321 = vsel %vm288, %v205, %v282
    %v322 = vsel %vm290, %v321, %v283
    %v323 = vrot.slane %v322, 2
    %v324 = vsel %vm293, %v205, %v282
    %v325 = vsel %vm286, %v283, %v324
    %v326 = vrot.slane %v325, 4
    %v327 = vrot.slane %v275, 2
    %v328 = vrot.slane %v275, 4
    %v329 = vrot.slane %v275, 6
    %330 = vst [vmem:[#allocation1] ss:$4 sm:$0xff] %v287
    %s331 = scalar_lea.vmem [#allocation1], 1
    %332 = vst [vmem:[%s331] ss:$4 sm:$0xff] %v292
    %s333 = scalar_lea.vmem [#allocation1], 2
    %334 = vst [vmem:[%s333] ss:$4 sm:$0xff] %v296
    %s335 = scalar_lea.vmem [#allocation1], 3
    %336 = vst [vmem:[%s335] ss:$4 sm:$0xff] %v299
    %s337 = scalar_lea.vmem [#allocation1], 32
    %338 = vst [vmem:[%s337] ss:$4 sm:$0xff] %v301
    %s339 = scalar_lea.vmem [#allocation1], 33
    %340 = vst [vmem:[%s339] ss:$4 sm:$0xff] %v304
    %s341 = scalar_lea.vmem [#allocation1], 34
    %342 = vst [vmem:[%s341] ss:$4 sm:$0xff] %v307
    %s343 = scalar_lea.vmem [#allocation1], 35
    %344 = vst [vmem:[%s343] ss:$4 sm:$0xff] %v309
    %v345 = vld.sshfl [vmem:[#allocation1] sm:$0xff pattern:$0x73625140]
    %v346 = vld.sshfl [vmem:[#allocation1 + $0x8] sm:$0xff pattern:$0x73625140]
    %v347 = vld.sshfl [vmem:[#allocation1 + $0x10] sm:$0xff pattern:$0x73625140]
    %v348 = vld.sshfl [vmem:[#allocation1 + $0x20] sm:$0xff pattern:$0x73625140]
    %v349 = vld.sshfl [vmem:[#allocation1 + $0x28] sm:$0xff pattern:$0x73625140]
    %v350 = vld.sshfl [vmem:[#allocation1 + $0x30] sm:$0xff pattern:$0x73625140]
    %351 = vst [vmem:[#allocation1] ss:$4 sm:$0xff] %v312
    %352 = vst [vmem:[%s331] ss:$4 sm:$0xff] %v315
    %353 = vst [vmem:[%s333] ss:$4 sm:$0xff] %v318
    %354 = vst [vmem:[%s335] ss:$4 sm:$0xff] %v320
    %355 = vst [vmem:[%s337] ss:$4 sm:$0xff] %v323
    %356 = vst [vmem:[%s339] ss:$4 sm:$0xff] %v326
    %v357 = vld.sshfl [vmem:[#allocation1] sm:$0xff pattern:$0x73625140]
    %v358 = vld.sshfl [vmem:[#allocation1 + $0x8] sm:$0xff pattern:$0x73625140]
    %v359 = vld.sshfl [vmem:[#allocation1 + $0x10] sm:$0xff pattern:$0x73625140]
    %v360 = vld.sshfl [vmem:[#allocation1 + $0x20] sm:$0xff pattern:$0x73625140]
    %v361 = vld.sshfl [vmem:[#allocation1 + $0x28] sm:$0xff pattern:$0x73625140]
    %v362 = vld.sshfl [vmem:[#allocation1 + $0x30] sm:$0xff pattern:$0x73625140]
    %375 = vst [vmem:[#allocation1] ss:$4 sm:$0xff] %v275
    %s376 = scalar_lea.vmem [#allocation1], 1
    %377 = vst [vmem:[%s376] ss:$4 sm:$0xff] %v327
    %s378 = scalar_lea.vmem [#allocation1], 2
    %379 = vst [vmem:[%s378] ss:$4 sm:$0xff] %v328
    %s380 = scalar_lea.vmem [#allocation1], 3
    %381 = vst [vmem:[%s380] ss:$4 sm:$0xff] %v329
    %s382 = scalar_lea.vmem [#allocation1], 32
    %383 = vst [vmem:[%s382] ss:$4 sm:$0xff] %v275
    %s384 = scalar_lea.vmem [#allocation1], 33
    %385 = vst [vmem:[%s384] ss:$4 sm:$0xff] %v327
    %s386 = scalar_lea.vmem [#allocation1], 34
    %387 = vst [vmem:[%s386] ss:$4 sm:$0xff] %v328
    %s388 = scalar_lea.vmem [#allocation1], 35
    %389 = vst [vmem:[%s388] ss:$4 sm:$0xff] %v275
    %v390 = vld.sshfl [vmem:[#allocation1] sm:$0xff pattern:$0x73625140]
    %v391 = vld.sshfl [vmem:[#allocation1 + $0x20] sm:$0xff pattern:$0x73625140]
    %392 = vst [vmem:[#allocation1] ss:$4 sm:$0xff] %v327
    %393 = vst [vmem:[%s376] ss:$4 sm:$0xff] %v328
    %394 = vst [vmem:[%s378] ss:$4 sm:$0xff] %v329
    %395 = vst [vmem:[%s380] ss:$4 sm:$0xff] %v275
    %396 = vst [vmem:[%s382] ss:$4 sm:$0xff] %v327
    %397 = vst [vmem:[%s384] ss:$4 sm:$0xff] %v328
    %v398 = vld.sshfl [vmem:[#allocation1] sm:$0xff pattern:$0x73625140]
    %v399 = vld.sshfl [vmem:[#allocation1 + $0x20] sm:$0xff pattern:$0x73625140]
    %404 = vmatpush.msra.mxu0 %v240
    %405 = vmatpush.msra.mxu0 %v239
    %406 = vmatpush.msra.mxu0 %v238
    %407 = vmatpush.msra.mxu0 %v237
    %408 = vmatpush.msra.mxu0 %v236
    %409 = vmatpush.msra.mxu0 %v235
    %410 = vmatpush.msra.mxu0 %v234
    %411 = vmatpush.msra.mxu0 %v233
    %412 = vmatpush.msra.mxu0 %v232
    %413 = vmatpush.msra.mxu0 %v231
    %414 = vmatpush.msra.mxu0 %v230
    %415 = vmatpush.msra.mxu0 %v229
    %416 = vmatpush.msra.mxu0 %v228
    %417 = vmatpush.msra.mxu0 %v227
    %418 = vmatpush.msra.mxu0 %v226
    %419 = vmatpush.msra.mxu0 %v225
    %420 = vmatmul.f32.gmra.mxu0 %v345
    %v421 = vpop.f32.mrf.mxu0
    %v422 = vadd.f32 %v390, %v421
    %423 = vmatmul.f32.gmra.mxu0 %v348
    %v424 = vpop.f32.mrf.mxu0
    %v425 = vadd.f32 %v391, %v424
    %426 = vmatmul.f32.gmra.mxu0 %v357
    %v427 = vpop.f32.mrf.mxu0
    %v428 = vadd.f32 %v398, %v427
    %429 = vmatmul.f32.gmra.mxu0 %v360
    %v430 = vpop.f32.mrf.mxu0
    %v431 = vadd.f32 %v399, %v430
    %432 = vdwg.mxu0
    %433 = vmatpush.msra.mxu0 %v256
    %434 = vmatpush.msra.mxu0 %v255
    %435 = vmatpush.msra.mxu0 %v254
    %436 = vmatpush.msra.mxu0 %v253
    %437 = vmatpush.msra.mxu0 %v252
    %438 = vmatpush.msra.mxu0 %v251
    %439 = vmatpush.msra.mxu0 %v250
    %440 = vmatpush.msra.mxu0 %v249
    %441 = vmatpush.msra.mxu0 %v248
    %442 = vmatpush.msra.mxu0 %v247
    %443 = vmatpush.msra.mxu0 %v246
    %444 = vmatpush.msra.mxu0 %v245
    %445 = vmatpush.msra.mxu0 %v244
    %446 = vmatpush.msra.mxu0 %v243
    %447 = vmatpush.msra.mxu0 %v242
    %448 = vmatpush.msra.mxu0 %v241
    %449 = vmatmul.f32.gmra.mxu0 %v346
    %v450 = vpop.f32.mrf.mxu0
    %v451 = vadd.f32 %v422, %v450
    %452 = vmatmul.f32.gmra.mxu0 %v349
    %v453 = vpop.f32.mrf.mxu0
    %v454 = vadd.f32 %v425, %v453
    %455 = vmatmul.f32.gmra.mxu0 %v358
    %v456 = vpop.f32.mrf.mxu0
    %v457 = vadd.f32 %v428, %v456
    %458 = vmatmul.f32.gmra.mxu0 %v361
    %v459 = vpop.f32.mrf.mxu0
    %v460 = vadd.f32 %v431, %v459
    %461 = vdwg.mxu0
    %462 = vmatpush.msra.mxu0 %v272
    %463 = vmatpush.msra.mxu0 %v271
    %464 = vmatpush.msra.mxu0 %v270
    %465 = vmatpush.msra.mxu0 %v269
    %466 = vmatpush.msra.mxu0 %v268
    %467 = vmatpush.msra.mxu0 %v267
    %468 = vmatpush.msra.mxu0 %v266
    %469 = vmatpush.msra.mxu0 %v265
    %470 = vmatpush.msra.mxu0 %v264
    %471 = vmatpush.msra.mxu0 %v263
    %472 = vmatpush.msra.mxu0 %v262
    %473 = vmatpush.msra.mxu0 %v261
    %474 = vmatpush.msra.mxu0 %v260
    %475 = vmatpush.msra.mxu0 %v259
    %476 = vmatpush.msra.mxu0 %v258
    %477 = vmatpush.msra.mxu0 %v257
    %478 = vmatmul.f32.gmra.mxu0 %v347
    %v479 = vpop.f32.mrf.mxu0
    %v480 = vadd.f32 %v451, %v479
    %481 = vmatmul.f32.gmra.mxu0 %v350
    %v482 = vpop.f32.mrf.mxu0
    %v483 = vadd.f32 %v454, %v482
    %484 = vmatmul.f32.gmra.mxu0 %v359
    %v485 = vpop.f32.mrf.mxu0
    %v486 = vadd.f32 %v457, %v485
    %487 = vmatmul.f32.gmra.mxu0 %v362
    %v488 = vpop.f32.mrf.mxu0
    %v489 = vadd.f32 %v460, %v488
    %490 = vdwg.mxu0
    %v495 = vrot.slane %v480, 2
    %v496 = vrot.slane %v480, 4
    %v497 = vrot.slane %v480, 6
    %v498 = vrot.slane %v483, 2
    %v499 = vrot.slane %v483, 4
    %v500 = vrot.slane %v483, 6
    %v501 = vrot.slane %v486, 2
    %v502 = vrot.slane %v486, 4
    %v503 = vrot.slane %v486, 6
    %v504 = vrot.slane %v489, 2
    %v515 = vmax.f32 %v480, 0.0
    %v516 = vmax.f32 %v495, 0.0
    %v517 = vmax.f32 %v496, 0.0
    %v518 = vmax.f32 %v497, 0.0
    %v519 = vmax.f32 %v483, 0.0
    %v520 = vmax.f32 %v498, 0.0
    %v521 = vmax.f32 %v499, 0.0
    %v522 = vmax.f32 %v500, 0.0
    %v523 = vmax.f32 %v486, 0.0
    %v524 = vmax.f32 %v501, 0.0
    %v525 = vmax.f32 %v502, 0.0
    %v526 = vmax.f32 %v503, 0.0
    %v527 = vmax.f32 %v489, 0.0
    %v528 = vmax.f32 %v504, 0.0
    %543 = vst [vmem:[#allocation1] ss:$4 sm:$0xff] %v515
    %s544 = scalar_lea.vmem [#allocation1], 1
    %545 = vst [vmem:[%s544] ss:$4 sm:$0xff] %v516
    %s546 = scalar_lea.vmem [#allocation1], 2
    %547 = vst [vmem:[%s546] ss:$4 sm:$0xff] %v517
    %s548 = scalar_lea.vmem [#allocation1], 3
    %549 = vst [vmem:[%s548] ss:$4 sm:$0xff] %v518
    %s550 = scalar_lea.vmem [#allocation1], 32
    %551 = vst [vmem:[%s550] ss:$4 sm:$0xff] %v519
    %s552 = scalar_lea.vmem [#allocation1], 33
    %553 = vst [vmem:[%s552] ss:$4 sm:$0xff] %v520
    %s554 = scalar_lea.vmem [#allocation1], 34
    %555 = vst [vmem:[%s554] ss:$4 sm:$0xff] %v521
    %v556 = vld.sshfl [vmem:[#allocation1] sm:$0xff pattern:$0x73625140]
    %v557 = vld.sshfl [vmem:[#allocation1 + $0x20] sm:$0xff pattern:$0x73625140]
    %558 = vst [vmem:[#allocation1] ss:$4 sm:$0xff] %v522
    %559 = vst [vmem:[%s544] ss:$4 sm:$0xff] %v523
    %560 = vst [vmem:[%s546] ss:$4 sm:$0xff] %v524
    %561 = vst [vmem:[%s548] ss:$4 sm:$0xff] %v525
    %562 = vst [vmem:[%s550] ss:$4 sm:$0xff] %v526
    %563 = vst [vmem:[%s552] ss:$4 sm:$0xff] %v527
    %564 = vst [vmem:[%s554] ss:$4 sm:$0xff] %v528
    %v565 = vld.sshfl [vmem:[#allocation1] sm:$0xff pattern:$0x73625140]
    %v566 = vld.sshfl [vmem:[#allocation1 + $0x20] sm:$0xff pattern:$0x73625140]
    %vm571 = vcmask 64512
    %v572 = vsel %vm571, %v556, -inf
    %vm573 = vcmask 62464
    %v574 = vsel %vm573, %v557, -inf
    %v575 = vmax.f32 %v572, %v574
    %v576 = vrot.slane %v575, 4
    %v577 = vmax.f32 %v575, %v576
    %v578 = vrot.slane %v577, 2
    %v579 = vmax.f32 %v577, %v578
    %v580 = vrot.slane %v579, 1
    %v581 = vmax.f32 %v579, %v580
    %v582 = vsel %vm571, %v565, -inf
    %v583 = vsel %vm573, %v566, -inf
    %v584 = vmax.f32 %v582, %v583
    %v585 = vrot.slane %v584, 4
    %v586 = vmax.f32 %v584, %v585
    %v587 = vrot.slane %v586, 2
    %v588 = vmax.f32 %v586, %v587
    %v589 = vrot.slane %v588, 1
    %v590 = vmax.f32 %v588, %v589
    %v591 = vld [vmem:[%s11] sm:$0xff]
    %vm594 = vcmask 1041409
    %v595 = vsel %vm594, %v590, %v581
    %v596 = vsel %vm571, %v595, 0
    %598 = vmatpush.msra.mxu0 0.0
    %599 = vmatpush.msra.mxu0 0.0
    %600 = vmatpush.msra.mxu0 0.0
    %601 = vmatpush.msra.mxu0 0.0
    %602 = vmatpush.msra.mxu0 0.0
    %603 = vmatpush.msra.mxu0 0.0
    %604 = vmatpush.msra.mxu0 0.0
    %605 = vmatpush.msra.mxu0 0.0
    %606 = vmatpush.msra.mxu0 0.0
    %607 = vmatpush.msra.mxu0 0.0
    %608 = vmatpush.msra.mxu0 0.0
    %609 = vmatpush.msra.mxu0 0.0
    %610 = vmatpush.msra.mxu0 0.0
    %611 = vmatpush.msra.mxu0 0.0
    %612 = vmatpush.msra.mxu0 0.0
    %613 = vmatpush.msra.mxu0 %v591
    %614 = vmatmul.f32.gmra.mxu0 %v596
    %v615 = vpop.f32.mrf.mxu0
    %v616 = vadd.f32 0.0, %v615
    %617 = vdwg.mxu0
    %v619 = vperm.slane %v206, 0
    %v621 = vadd.f32 %v619, %v616
    %vm622 = vcmask 1044480
    %v623 = vrot.slane %v202, 3
    %v624 = vrot.slane %v203, 3
    %v625 = vsel %vm622, %v623, %v624
    %v626 = vrot.slane %v204, 3
    %v627 = vrot.slane %v205, 3
    %v628 = vsel %vm622, %v626, %v627
    %v629 = vld [vmem:[#allocation7] sm:$0xff]
    %v630 = vld [vmem:[#allocation7 + $0x8] sm:$0xff]
    %v631 = vld [vmem:[#allocation7 + $0x10] sm:$0xff]
    %v632 = vld [vmem:[#allocation7 + $0x18] sm:$0xff]
    %v633 = vld [vmem:[#allocation7 + $0x20] sm:$0xff]
    %v634 = vld [vmem:[#allocation7 + $0x28] sm:$0xff]
    %v635 = vld [vmem:[#allocation7 + $0x30] sm:$0xff]
    %v636 = vld [vmem:[#allocation7 + $0x38] sm:$0xff]
    %v637 = vld [vmem:[#allocation7 + $0x40] sm:$0xff]
    %v638 = vld [vmem:[#allocation7 + $0x48] sm:$0xff]
    %v639 = vld [vmem:[#allocation7 + $0x50] sm:$0xff]
    %v640 = vld [vmem:[#allocation7 + $0x58] sm:$0xff]
    %v641 = vld [vmem:[#allocation7 + $0x60] sm:$0xff]
    %v642 = vld [vmem:[#allocation7 + $0x68] sm:$0xff]
    %v643 = vld [vmem:[#allocation7 + $0x70] sm:$0xff]
    %v644 = vld [vmem:[#allocation7 + $0x78] sm:$0xff]
    %v645 = vld [vmem:[#allocation7 + $0x80] sm:$0xff]
    %v646 = vld [vmem:[#allocation7 + $0x88] sm:$0xff]
    %v647 = vld [vmem:[#allocation7 + $0x90] sm:$0xff]
    %v648 = vld [vmem:[#allocation7 + $0x98] sm:$0xff]
    %v649 = vld [vmem:[#allocation7 + $0xa0] sm:$0xff]
    %v650 = vld [vmem:[#allocation7 + $0xa8] sm:$0xff]
    %v651 = vld [vmem:[#allocation7 + $0xb0] sm:$0xff]
    %v652 = vld [vmem:[#allocation7 + $0xb8] sm:$0xff]
    %v653 = vld [vmem:[#allocation7 + $0xc0] sm:$0xff]
    %v654 = vld [vmem:[#allocation7 + $0xc8] sm:$0xff]
    %v655 = vld [vmem:[#allocation7 + $0xd0] sm:$0xff]
    %v656 = vld [vmem:[#allocation7 + $0xd8] sm:$0xff]
    %v657 = vld [vmem:[#allocation7 + $0xe0] sm:$0xff]
    %v658 = vld [vmem:[#allocation7 + $0xe8] sm:$0xff]
    %v659 = vld [vmem:[#allocation7 + $0xf0] sm:$0xff]
    %v660 = vld [vmem:[#allocation7 + $0xf8] sm:$0xff]
    %v661 = vld [vmem:[#allocation7 + $0x100] sm:$0xff]
    %v662 = vld [vmem:[#allocation7 + $0x108] sm:$0xff]
    %v663 = vld [vmem:[#allocation7 + $0x110] sm:$0xff]
    %v664 = vld [vmem:[#allocation7 + $0x118] sm:$0xff]
    %v665 = vld [vmem:[#allocation7 + $0x120] sm:$0xff]
    %v666 = vld [vmem:[#allocation7 + $0x128] sm:$0xff]
    %v667 = vld [vmem:[#allocation7 + $0x130] sm:$0xff]
    %v668 = vld [vmem:[#allocation7 + $0x138] sm:$0xff]
    %v669 = vld [vmem:[#allocation7 + $0x140] sm:$0xff]
    %v670 = vld [vmem:[#allocation7 + $0x148] sm:$0xff]
    %v671 = vld [vmem:[#allocation7 + $0x150] sm:$0xff]
    %v672 = vld [vmem:[#allocation7 + $0x158] sm:$0xff]
    %v673 = vld [vmem:[#allocation7 + $0x160] sm:$0xff]
    %v674 = vld [vmem:[#allocation7 + $0x168] sm:$0xff]
    %v675 = vld [vmem:[#allocation7 + $0x170] sm:$0xff]
    %v676 = vld [vmem:[#allocation7 + $0x178] sm:$0xff]
    %v677 = vld [vmem:[#allocation7 + $0x180] sm:$0xff]
    %v678 = vld [vmem:[#allocation7 + $0x188] sm:$0xff]
    %v679 = vld [vmem:[#allocation7 + $0x190] sm:$0xff]
    %v680 = vld [vmem:[#allocation7 + $0x198] sm:$0xff]
    %v681 = vld [vmem:[#allocation7 + $0x1a0] sm:$0xff]
    %v682 = vld [vmem:[#allocation7 + $0x1a8] sm:$0xff]
    %v683 = vld [vmem:[#allocation7 + $0x1b0] sm:$0xff]
    %v684 = vld [vmem:[#allocation7 + $0x1b8] sm:$0xff]
    %v685 = vld [vmem:[#allocation7 + $0x1c0] sm:$0xff]
    %v686 = vld [vmem:[#allocation7 + $0x1c8] sm:$0xff]
    %v687 = vld [vmem:[#allocation7 + $0x1d0] sm:$0xff]
    %v688 = vld [vmem:[#allocation7 + $0x1d8] sm:$0xff]
    %v689 = vld [vmem:[#allocation7 + $0x1e0] sm:$0xff]
    %v690 = vld [vmem:[#allocation7 + $0x1e8] sm:$0xff]
    %v691 = vld [vmem:[#allocation7 + $0x1f0] sm:$0xff]
    %v692 = vld [vmem:[#allocation7 + $0x1f8] sm:$0xff]
    %v693 = vld [vmem:[#allocation11] sm:$0x1]
    %v695 = vperm.slane %v693, 0
    %v696 = vrot.slane %v214, 7
    %v697 = vrot.slane %v221, 6
    %v698 = vrot.slane %v625, 5
    %v699 = vrot.slane %v213, 7
    %v700 = vrot.slane %v220, 6
    %v701 = vrot.slane %v624, 5
    %v702 = vrot.slane %v217, 7
    %v703 = vrot.slane %v224, 6
    %v704 = vrot.slane %v628, 5
    %v705 = vrot.slane %v216, 7
    %v706 = vrot.slane %v223, 6
    %v707 = vrot.slane %v627, 5
    %vm708 = vcmask 1040384
    %v709 = vsel %vm708, %v202, %v696
    %vm710 = vcmask 1042434
    %v711 = vsel %vm710, %v697, %v698
    %v712 = vsel %vm284, %v709, %v711
    %v713 = vsel %vm594, %v202, %v696
    %vm714 = vcmask 1043459
    %v715 = vsel %vm714, %v697, %v698
    %vm716 = vcmask 1042433
    %v717 = vsel %vm716, %v713, %v715
    %v718 = vrot.slane %v717, 1
    %v719 = vsel %vm710, %v202, %v696
    %vm720 = vcmask 1044484
    %v721 = vsel %vm720, %v697, %v698
    %v722 = vsel %vm288, %v719, %v721
    %v723 = vrot.slane %v722, 2
    %v724 = vsel %vm714, %v202, %v696
    %vm725 = vcmask 1045509
    %v726 = vsel %vm725, %v697, %v698
    %vm727 = vcmask 1044483
    %v728 = vsel %vm727, %v724, %v726
    %v729 = vrot.slane %v728, 3
    %v730 = vsel %vm720, %v202, %v696
    %vm731 = vcmask 1046534
    %v732 = vsel %vm731, %v697, %v698
    %v733 = vsel %vm293, %v730, %v732
    %v734 = vrot.slane %v733, 4
    %v735 = vsel %vm725, %v202, %v696
    %v736 = vsel %vm211, %v698, %v697
    %vm737 = vcmask 1046533
    %v738 = vsel %vm737, %v735, %v736
    %v739 = vrot.slane %v738, 5
    %v740 = vsel %vm731, %v202, %v696
    %v741 = vsel %vm708, %v697, %v698
    %v742 = vsel %vm218, %v741, %v740
    %v743 = vrot.slane %v742, 6
    %v744 = vsel %vm211, %v696, %v202
    %v745 = vsel %vm594, %v697, %v698
    %vm746 = vcmask 1046529
    %v747 = vsel %vm746, %v745, %v744
    %v748 = vrot.slane %v747, 7
    %v749 = vsel %vm708, %v203, %v699
    %v750 = vsel %vm710, %v700, %v701
    %v751 = vsel %vm284, %v749, %v750
    %v752 = vsel %vm594, %v203, %v699
    %v753 = vsel %vm714, %v700, %v701
    %v754 = vsel %vm716, %v752, %v753
    %v755 = vrot.slane %v754, 1
    %v756 = vsel %vm710, %v203, %v699
    %v757 = vsel %vm720, %v700, %v701
    %v758 = vsel %vm288, %v756, %v757
    %v759 = vrot.slane %v758, 2
    %v760 = vsel %vm714, %v203, %v699
    %v761 = vsel %vm725, %v700, %v701
    %v762 = vsel %vm727, %v760, %v761
    %v763 = vrot.slane %v762, 3
    %v764 = vsel %vm720, %v203, %v699
    %v765 = vsel %vm731, %v700, %v701
    %v766 = vsel %vm293, %v764, %v765
    %v767 = vrot.slane %v766, 4
    %v768 = vsel %vm708, %v204, %v702
    %v769 = vsel %vm710, %v703, %v704
    %v770 = vsel %vm284, %v768, %v769
    %v771 = vsel %vm594, %v204, %v702
    %v772 = vsel %vm714, %v703, %v704
    %v773 = vsel %vm716, %v771, %v772
    %v774 = vrot.slane %v773, 1
    %v775 = vsel %vm710, %v204, %v702
    %v776 = vsel %vm720, %v703, %v704
    %v777 = vsel %vm288, %v775, %v776
    %v778 = vrot.slane %v777, 2
    %v779 = vsel %vm714, %v204, %v702
    %v780 = vsel %vm725, %v703, %v704
    %v781 = vsel %vm727, %v779, %v780
    %v782 = vrot.slane %v781, 3
    %v783 = vsel %vm720, %v204, %v702
    %v784 = vsel %vm731, %v703, %v704
    %v785 = vsel %vm293, %v783, %v784
    %v786 = vrot.slane %v785, 4
    %v787 = vsel %vm725, %v204, %v702
    %v788 = vsel %vm211, %v704, %v703
    %v789 = vsel %vm737, %v787, %v788
    %v790 = vrot.slane %v789, 5
    %v791 = vsel %vm731, %v204, %v702
    %v792 = vsel %vm708, %v703, %v704
    %v793 = vsel %vm218, %v792, %v791
    %v794 = vrot.slane %v793, 6
    %v795 = vsel %vm211, %v702, %v204
    %v796 = vsel %vm594, %v703, %v704
    %v797 = vsel %vm746, %v796, %v795
    %v798 = vrot.slane %v797, 7
    %v799 = vsel %vm708, %v205, %v705
    %v800 = vsel %vm710, %v706, %v707
    %v801 = vsel %vm284, %v799, %v800
    %v802 = vsel %vm594, %v205, %v705
    %v803 = vsel %vm714, %v706, %v707
    %v804 = vsel %vm716, %v802, %v803
    %v805 = vrot.slane %v804, 1
    %v806 = vsel %vm710, %v205, %v705
    %v807 = vsel %vm720, %v706, %v707
    %v808 = vsel %vm288, %v806, %v807
    %v809 = vrot.slane %v808, 2
    %v810 = vsel %vm714, %v205, %v705
    %v811 = vsel %vm725, %v706, %v707
    %v812 = vsel %vm727, %v810, %v811
    %v813 = vrot.slane %v812, 3
    %v814 = vsel %vm720, %v205, %v705
    %v815 = vsel %vm731, %v706, %v707
    %v816 = vsel %vm293, %v814, %v815
    %v817 = vrot.slane %v816, 4
    %v818 = vrot.slane %v695, 1
    %v819 = vrot.slane %v695, 2
    %v820 = vrot.slane %v695, 3
    %v821 = vrot.slane %v695, 4
    %v822 = vrot.slane %v695, 5
    %v823 = vrot.slane %v695, 6
    %v824 = vrot.slane %v695, 7
    %825 = vst [vmem:[#allocation1] ss:$9 sm:$0xff] %v712
    %s826 = scalar_lea.vmem [#allocation1], 1
    %827 = vst [vmem:[%s826] ss:$9 sm:$0xff] %v718
    %s828 = scalar_lea.vmem [#allocation1], 2
    %829 = vst [vmem:[%s828] ss:$9 sm:$0xff] %v723
    %s830 = scalar_lea.vmem [#allocation1], 3
    %831 = vst [vmem:[%s830] ss:$9 sm:$0xff] %v729
    %s832 = scalar_lea.vmem [#allocation1], 4
    %833 = vst [vmem:[%s832] ss:$9 sm:$0xff] %v734
    %s834 = scalar_lea.vmem [#allocation1], 5
    %835 = vst [vmem:[%s834] ss:$9 sm:$0xff] %v739
    %s836 = scalar_lea.vmem [#allocation1], 6
    %837 = vst [vmem:[%s836] ss:$9 sm:$0xff] %v743
    %s838 = scalar_lea.vmem [#allocation1], 7
    %839 = vst [vmem:[%s838] ss:$9 sm:$0xff] %v748
    %v840 = vld [vmem:[#allocation1] sm:$0xff]
    %v841 = vld [vmem:[#allocation1 + $0x9] sm:$0xff]
    %v842 = vld [vmem:[#allocation1 + $0x12] sm:$0xff]
    %v843 = vld [vmem:[#allocation1 + $0x1b] sm:$0xff]
    %844 = vst [vmem:[#allocation1] ss:$9 sm:$0xff] %v751
    %845 = vst [vmem:[%s826] ss:$9 sm:$0xff] %v755
    %846 = vst [vmem:[%s828] ss:$9 sm:$0xff] %v759
    %847 = vst [vmem:[%s830] ss:$9 sm:$0xff] %v763
    %848 = vst [vmem:[%s832] ss:$9 sm:$0xff] %v767
    %849 = vst [vmem:[%s834] ss:$9 sm:$0xff] %v770
    %850 = vst [vmem:[%s836] ss:$9 sm:$0xff] %v774
    %851 = vst [vmem:[%s838] ss:$9 sm:$0xff] %v778
    %v852 = vld [vmem:[#allocation1] sm:$0xff]
    %v853 = vld [vmem:[#allocation1 + $0x9] sm:$0xff]
    %v854 = vld [vmem:[#allocation1 + $0x12] sm:$0xff]
    %v855 = vld [vmem:[#allocation1 + $0x1b] sm:$0xff]
    %856 = vst [vmem:[#allocation1] ss:$9 sm:$0xff] %v782
    %857 = vst [vmem:[%s826] ss:$9 sm:$0xff] %v786
    %858 = vst [vmem:[%s828] ss:$9 sm:$0xff] %v790
    %859 = vst [vmem:[%s830] ss:$9 sm:$0xff] %v794
    %860 = vst [vmem:[%s832] ss:$9 sm:$0xff] %v798
    %861 = vst [vmem:[%s834] ss:$9 sm:$0xff] %v801
    %862 = vst [vmem:[%s836] ss:$9 sm:$0xff] %v805
    %863 = vst [vmem:[%s838] ss:$9 sm:$0xff] %v809
    %v864 = vld [vmem:[#allocation1] sm:$0xff]
    %v865 = vld [vmem:[#allocation1 + $0x9] sm:$0xff]
    %v866 = vld [vmem:[#allocation1 + $0x12] sm:$0xff]
    %v867 = vld [vmem:[#allocation1 + $0x1b] sm:$0xff]
    %868 = vst [vmem:[#allocation1] ss:$9 sm:$0xff] %v813
    %869 = vst [vmem:[%s826] ss:$9 sm:$0xff] %v817
    %v870 = vld [vmem:[#allocation1] sm:$0xff]
    %v871 = vld [vmem:[#allocation1 + $0x9] sm:$0xff]
    %v872 = vld [vmem:[#allocation1 + $0x12] sm:$0xff]
    %v873 = vld [vmem:[#allocation1 + $0x1b] sm:$0xff]
    %890 = vst [vmem:[#allocation1] ss:$9 sm:$0xff] %v695
    %s891 = scalar_lea.vmem [#allocation1], 1
    %892 = vst [vmem:[%s891] ss:$9 sm:$0xff] %v818
    %s893 = scalar_lea.vmem [#allocation1], 2
    %894 = vst [vmem:[%s893] ss:$9 sm:$0xff] %v819
    %s895 = scalar_lea.vmem [#allocation1], 3
    %896 = vst [vmem:[%s895] ss:$9 sm:$0xff] %v820
    %s897 = scalar_lea.vmem [#allocation1], 4
    %898 = vst [vmem:[%s897] ss:$9 sm:$0xff] %v821
    %s899 = scalar_lea.vmem [#allocation1], 5
    %900 = vst [vmem:[%s899] ss:$9 sm:$0xff] %v822
    %s901 = scalar_lea.vmem [#allocation1], 6
    %902 = vst [vmem:[%s901] ss:$9 sm:$0xff] %v823
    %s903 = scalar_lea.vmem [#allocation1], 7
    %904 = vst [vmem:[%s903] ss:$9 sm:$0xff] %v824
    %v905 = vld [vmem:[#allocation1] sm:$0xff]
    %906 = vst [vmem:[#allocation1] ss:$9 sm:$0xff] %v695
    %907 = vst [vmem:[%s891] ss:$9 sm:$0xff] %v818
    %908 = vst [vmem:[%s893] ss:$9 sm:$0xff] %v819
    %909 = vst [vmem:[%s895] ss:$9 sm:$0xff] %v820
    %910 = vst [vmem:[%s897] ss:$9 sm:$0xff] %v821
    %911 = vst [vmem:[%s899] ss:$9 sm:$0xff] %v695
    %912 = vst [vmem:[%s901] ss:$9 sm:$0xff] %v818
    %913 = vst [vmem:[%s903] ss:$9 sm:$0xff] %v819
    %v914 = vld [vmem:[#allocation1] sm:$0xff]
    %915 = vst [vmem:[#allocation1] ss:$9 sm:$0xff] %v820
    %916 = vst [vmem:[%s891] ss:$9 sm:$0xff] %v821
    %917 = vst [vmem:[%s893] ss:$9 sm:$0xff] %v822
    %918 = vst [vmem:[%s895] ss:$9 sm:$0xff] %v823
    %919 = vst [vmem:[%s897] ss:$9 sm:$0xff] %v824
    %920 = vst [vmem:[%s899] ss:$9 sm:$0xff] %v695
    %921 = vst [vmem:[%s901] ss:$9 sm:$0xff] %v818
    %922 = vst [vmem:[%s903] ss:$9 sm:$0xff] %v819
    %v923 = vld [vmem:[#allocation1] sm:$0xff]
    %924 = vst [vmem:[#allocation1] ss:$9 sm:$0xff] %v820
    %925 = vst [vmem:[%s891] ss:$9 sm:$0xff] %v821
    %v926 = vld [vmem:[#allocation1] sm:$0xff]
    %931 = vmatpush.msra.mxu0 %v644
    %932 = vmatpush.msra.mxu0 %v643
    %933 = vmatpush.msra.mxu0 %v642
    %934 = vmatpush.msra.mxu0 %v641
    %935 = vmatpush.msra.mxu0 %v640
    %936 = vmatpush.msra.mxu0 %v639
    %937 = vmatpush.msra.mxu0 %v638
    %938 = vmatpush.msra.mxu0 %v637
    %939 = vmatpush.msra.mxu0 %v636
    %940 = vmatpush.msra.mxu0 %v635
    %941 = vmatpush.msra.mxu0 %v634
    %942 = vmatpush.msra.mxu0 %v633
    %943 = vmatpush.msra.mxu0 %v632
    %944 = vmatpush.msra.mxu0 %v631
    %945 = vmatpush.msra.mxu0 %v630
    %946 = vmatpush.msra.mxu0 %v629
    %947 = vmatmul.f32.gmra.mxu0 %v840
    %v948 = vpop.f32.mrf.mxu0
    %v949 = vadd.f32 %v905, %v948
    %950 = vmatmul.f32.gmra.mxu0 %v852
    %v951 = vpop.f32.mrf.mxu0
    %v952 = vadd.f32 %v914, %v951
    %953 = vmatmul.f32.gmra.mxu0 %v864
    %v954 = vpop.f32.mrf.mxu0
    %v955 = vadd.f32 %v923, %v954
    %956 = vmatmul.f32.gmra.mxu0 %v870
    %v957 = vpop.f32.mrf.mxu0
    %v958 = vadd.f32 %v926, %v957
    %959 = vdwg.mxu0
    %960 = vmatpush.msra.mxu0 %v660
    %961 = vmatpush.msra.mxu0 %v659
    %962 = vmatpush.msra.mxu0 %v658
    %963 = vmatpush.msra.mxu0 %v657
    %964 = vmatpush.msra.mxu0 %v656
    %965 = vmatpush.msra.mxu0 %v655
    %966 = vmatpush.msra.mxu0 %v654
    %967 = vmatpush.msra.mxu0 %v653
    %968 = vmatpush.msra.mxu0 %v652
    %969 = vmatpush.msra.mxu0 %v651
    %970 = vmatpush.msra.mxu0 %v650
    %971 = vmatpush.msra.mxu0 %v649
    %972 = vmatpush.msra.mxu0 %v648
    %973 = vmatpush.msra.mxu0 %v647
    %974 = vmatpush.msra.mxu0 %v646
    %975 = vmatpush.msra.mxu0 %v645
    %976 = vmatmul.f32.gmra.mxu0 %v841
    %v977 = vpop.f32.mrf.mxu0
    %v978 = vadd.f32 %v949, %v977
    %979 = vmatmul.f32.gmra.mxu0 %v853
    %v980 = vpop.f32.mrf.mxu0
    %v981 = vadd.f32 %v952, %v980
    %982 = vmatmul.f32.gmra.mxu0 %v865
    %v983 = vpop.f32.mrf.mxu0
    %v984 = vadd.f32 %v955, %v983
    %985 = vmatmul.f32.gmra.mxu0 %v871
    %v986 = vpop.f32.mrf.mxu0
    %v987 = vadd.f32 %v958, %v986
    %988 = vdwg.mxu0
    %989 = vmatpush.msra.mxu0 %v676
    %990 = vmatpush.msra.mxu0 %v675
    %991 = vmatpush.msra.mxu0 %v674
    %992 = vmatpush.msra.mxu0 %v673
    %993 = vmatpush.msra.mxu0 %v672
    %994 = vmatpush.msra.mxu0 %v671
    %995 = vmatpush.msra.mxu0 %v670
    %996 = vmatpush.msra.mxu0 %v669
    %997 = vmatpush.msra.mxu0 %v668
    %998 = vmatpush.msra.mxu0 %v667
    %999 = vmatpush.msra.mxu0 %v666
    %1000 = vmatpush.msra.mxu0 %v665
    %1001 = vmatpush.msra.mxu0 %v664
    %1002 = vmatpush.msra.mxu0 %v663
    %1003 = vmatpush.msra.mxu0 %v662
    %1004 = vmatpush.msra.mxu0 %v661
    %1005 = vmatmul.f32.gmra.mxu0 %v842
    %v1006 = vpop.f32.mrf.mxu0
    %v1007 = vadd.f32 %v978, %v1006
    %1008 = vmatmul.f32.gmra.mxu0 %v854
    %v1009 = vpop.f32.mrf.mxu0
    %v1010 = vadd.f32 %v981, %v1009
    %1011 = vmatmul.f32.gmra.mxu0 %v866
    %v1012 = vpop.f32.mrf.mxu0
    %v1013 = vadd.f32 %v984, %v1012
    %1014 = vmatmul.f32.gmra.mxu0 %v872
    %v1015 = vpop.f32.mrf.mxu0
    %v1016 = vadd.f32 %v987, %v1015
    %1017 = vdwg.mxu0
    %1018 = vmatpush.msra.mxu0 %v692
    %1019 = vmatpush.msra.mxu0 %v691
    %1020 = vmatpush.msra.mxu0 %v690
    %1021 = vmatpush.msra.mxu0 %v689
    %1022 = vmatpush.msra.mxu0 %v688
    %1023 = vmatpush.msra.mxu0 %v687
    %1024 = vmatpush.msra.mxu0 %v686
    %1025 = vmatpush.msra.mxu0 %v685
    %1026 = vmatpush.msra.mxu0 %v684
    %1027 = vmatpush.msra.mxu0 %v683
    %1028 = vmatpush.msra.mxu0 %v682
    %1029 = vmatpush.msra.mxu0 %v681
    %1030 = vmatpush.msra.mxu0 %v680
    %1031 = vmatpush.msra.mxu0 %v679
    %1032 = vmatpush.msra.mxu0 %v678
    %1033 = vmatpush.msra.mxu0 %v677
    %1034 = vmatmul.f32.gmra.mxu0 %v843
    %v1035 = vpop.f32.mrf.mxu0
    %v1036 = vadd.f32 %v1007, %v1035
    %1037 = vmatmul.f32.gmra.mxu0 %v855
    %v1038 = vpop.f32.mrf.mxu0
    %v1039 = vadd.f32 %v1010, %v1038
    %1040 = vmatmul.f32.gmra.mxu0 %v867
    %v1041 = vpop.f32.mrf.mxu0
    %v1042 = vadd.f32 %v1013, %v1041
    %1043 = vmatmul.f32.gmra.mxu0 %v873
    %v1044 = vpop.f32.mrf.mxu0
    %v1045 = vadd.f32 %v1016, %v1044
    %1046 = vdwg.mxu0
    %v1051 = vrot.slane %v1036, 1
    %v1052 = vrot.slane %v1036, 2
    %v1053 = vrot.slane %v1036, 3
    %v1054 = vrot.slane %v1036, 4
    %v1055 = vrot.slane %v1036, 5
    %v1056 = vrot.slane %v1036, 6
    %v1057 = vrot.slane %v1036, 7
    %v1058 = vrot.slane %v1039, 1
    %v1059 = vrot.slane %v1039, 2
    %v1060 = vrot.slane %v1039, 3
    %v1061 = vrot.slane %v1039, 4
    %v1062 = vrot.slane %v1039, 5
    %v1063 = vrot.slane %v1039, 6
    %v1064 = vrot.slane %v1039, 7
    %v1065 = vrot.slane %v1042, 1
    %v1066 = vrot.slane %v1042, 2
    %v1067 = vrot.slane %v1042, 3
    %v1068 = vrot.slane %v1042, 4
    %v1069 = vrot.slane %v1042, 5
    %v1070 = vrot.slane %v1042, 6
    %v1071 = vrot.slane %v1042, 7
    %v1072 = vrot.slane %v1045, 1
    %v1095 = vmax.f32 %v1036, 0.0
    %v1096 = vmax.f32 %v1051, 0.0
    %v1097 = vmax.f32 %v1052, 0.0
    %v1098 = vmax.f32 %v1053, 0.0
    %v1099 = vmax.f32 %v1054, 0.0
    %v1100 = vmax.f32 %v1055, 0.0
    %v1101 = vmax.f32 %v1056, 0.0
    %v1102 = vmax.f32 %v1057, 0.0
    %v1103 = vmax.f32 %v1039, 0.0
    %v1104 = vmax.f32 %v1058, 0.0
    %v1105 = vmax.f32 %v1059, 0.0
    %v1106 = vmax.f32 %v1060, 0.0
    %v1107 = vmax.f32 %v1061, 0.0
    %v1108 = vmax.f32 %v1062, 0.0
    %v1109 = vmax.f32 %v1063, 0.0
    %v1110 = vmax.f32 %v1064, 0.0
    %v1111 = vmax.f32 %v1042, 0.0
    %v1112 = vmax.f32 %v1065, 0.0
    %v1113 = vmax.f32 %v1066, 0.0
    %v1114 = vmax.f32 %v1067, 0.0
    %v1115 = vmax.f32 %v1068, 0.0
    %v1116 = vmax.f32 %v1069, 0.0
    %v1117 = vmax.f32 %v1070, 0.0
    %v1118 = vmax.f32 %v1071, 0.0
    %v1119 = vmax.f32 %v1045, 0.0
    %v1120 = vmax.f32 %v1072, 0.0
    %1147 = vst [vmem:[#allocation1] ss:$9 sm:$0xff] %v1095
    %s1148 = scalar_lea.vmem [#allocation1], 1
    %1149 = vst [vmem:[%s1148] ss:$9 sm:$0xff] %v1096
    %s1150 = scalar_lea.vmem [#allocation1], 2
    %1151 = vst [vmem:[%s1150] ss:$9 sm:$0xff] %v1097
    %s1152 = scalar_lea.vmem [#allocation1], 3
    %1153 = vst [vmem:[%s1152] ss:$9 sm:$0xff] %v1098
    %s1154 = scalar_lea.vmem [#allocation1], 4
    %1155 = vst [vmem:[%s1154] ss:$9 sm:$0xff] %v1099
    %s1156 = scalar_lea.vmem [#allocation1], 5
    %1157 = vst [vmem:[%s1156] ss:$9 sm:$0xff] %v1100
    %s1158 = scalar_lea.vmem [#allocation1], 6
    %1159 = vst [vmem:[%s1158] ss:$9 sm:$0xff] %v1101
    %s1160 = scalar_lea.vmem [#allocation1], 7
    %1161 = vst [vmem:[%s1160] ss:$9 sm:$0xff] %v1102
    %v1162 = vld [vmem:[#allocation1] sm:$0xff]
    %1163 = vst [vmem:[#allocation1] ss:$9 sm:$0xff] %v1103
    %1164 = vst [vmem:[%s1148] ss:$9 sm:$0xff] %v1104
    %1165 = vst [vmem:[%s1150] ss:$9 sm:$0xff] %v1105
    %1166 = vst [vmem:[%s1152] ss:$9 sm:$0xff] %v1106
    %1167 = vst [vmem:[%s1154] ss:$9 sm:$0xff] %v1107
    %v1168 = vld [vmem:[#allocation1] sm:$0xff]
    %1169 = vst [vmem:[#allocation1] ss:$9 sm:$0xff] %v1108
    %1170 = vst [vmem:[%s1148] ss:$9 sm:$0xff] %v1109
    %1171 = vst [vmem:[%s1150] ss:$9 sm:$0xff] %v1110
    %1172 = vst [vmem:[%s1152] ss:$9 sm:$0xff] %v1111
    %1173 = vst [vmem:[%s1154] ss:$9 sm:$0xff] %v1112
    %1174 = vst [vmem:[%s1156] ss:$9 sm:$0xff] %v1113
    %1175 = vst [vmem:[%s1158] ss:$9 sm:$0xff] %v1114
    %1176 = vst [vmem:[%s1160] ss:$9 sm:$0xff] %v1115
    %v1177 = vld [vmem:[#allocation1] sm:$0xff]
    %1178 = vst [vmem:[#allocation1] ss:$9 sm:$0xff] %v1116
    %1179 = vst [vmem:[%s1148] ss:$9 sm:$0xff] %v1117
    %1180 = vst [vmem:[%s1150] ss:$9 sm:$0xff] %v1118
    %1181 = vst [vmem:[%s1152] ss:$9 sm:$0xff] %v1119
    %1182 = vst [vmem:[%s1154] ss:$9 sm:$0xff] %v1120
    %v1183 = vld [vmem:[#allocation1] sm:$0xff]
    %v1188 = vsel %vm571, %v1162, -inf
    %vm1189 = vcmask 61440
    %v1190 = vsel %vm1189, %v1168, -inf
    %v1191 = vmax.f32 %v1188, %v1190
    %v1192 = vrot.slane %v1191, 4
    %v1193 = vmax.f32 %v1191, %v1192
    %v1194 = vrot.slane %v1193, 2
    %v1195 = vmax.f32 %v1193, %v1194
    %v1196 = vrot.slane %v1195, 1
    %v1197 = vmax.f32 %v1195, %v1196
    %v1198 = vsel %vm571, %v1177, -inf
    %v1199 = vsel %vm1189, %v1183, -inf
    %v1200 = vmax.f32 %v1198, %v1199
    %v1201 = vrot.slane %v1200, 4
    %v1202 = vmax.f32 %v1200, %v1201
    %v1203 = vrot.slane %v1202, 2
    %v1204 = vmax.f32 %v1202, %v1203
    %v1205 = vrot.slane %v1204, 1
    %v1206 = vmax.f32 %v1204, %v1205
    %v1207 = vld [vmem:[%s12] sm:$0xff]
    %v1210 = vsel %vm594, %v1206, %v1197
    %v1211 = vsel %vm571, %v1210, 0
    %1213 = vmatpush.msra.mxu0 0.0
    %1214 = vmatpush.msra.mxu0 0.0
    %1215 = vmatpush.msra.mxu0 0.0
    %1216 = vmatpush.msra.mxu0 0.0
    %1217 = vmatpush.msra.mxu0 0.0
    %1218 = vmatpush.msra.mxu0 0.0
    %1219 = vmatpush.msra.mxu0 0.0
    %1220 = vmatpush.msra.mxu0 0.0
    %1221 = vmatpush.msra.mxu0 0.0
    %1222 = vmatpush.msra.mxu0 0.0
    %1223 = vmatpush.msra.mxu0 0.0
    %1224 = vmatpush.msra.mxu0 0.0
    %1225 = vmatpush.msra.mxu0 0.0
    %1226 = vmatpush.msra.mxu0 0.0
    %1227 = vmatpush.msra.mxu0 0.0
    %1228 = vmatpush.msra.mxu0 %v1207
    %1229 = vmatmul.f32.gmra.mxu0 %v1211
    %v1230 = vpop.f32.mrf.mxu0
    %v1231 = vadd.f32 0.0, %v1230
    %1232 = vdwg.mxu0
    %v1233 = vadd.f32 %v621, %v1231
    %v1234 = vrot.slane %v202, 4
    %v1235 = vrot.slane %v203, 4
    %v1236 = vsel %vm286, %v1234, %v1235
    %v1237 = vrot.slane %v204, 4
    %v1238 = vrot.slane %v205, 4
    %v1239 = vsel %vm286, %v1237, %v1238
    %v1240 = vld [vmem:[#allocation8] sm:$0xff]
    %v1241 = vld [vmem:[#allocation8 + $0x8] sm:$0xff]
    %v1242 = vld [vmem:[#allocation8 + $0x10] sm:$0xff]
    %v1243 = vld [vmem:[#allocation8 + $0x18] sm:$0xff]
    %v1244 = vld [vmem:[#allocation8 + $0x20] sm:$0xff]
    %v1245 = vld [vmem:[#allocation8 + $0x28] sm:$0xff]
    %v1246 = vld [vmem:[#allocation8 + $0x30] sm:$0xff]
    %v1247 = vld [vmem:[#allocation8 + $0x38] sm:$0xff]
    %v1248 = vld [vmem:[#allocation8 + $0x40] sm:$0xff]
    %v1249 = vld [vmem:[#allocation8 + $0x48] sm:$0xff]
    %v1250 = vld [vmem:[#allocation8 + $0x50] sm:$0xff]
    %v1251 = vld [vmem:[#allocation8 + $0x58] sm:$0xff]
    %v1252 = vld [vmem:[#allocation8 + $0x60] sm:$0xff]
    %v1253 = vld [vmem:[#allocation8 + $0x68] sm:$0xff]
    %v1254 = vld [vmem:[#allocation8 + $0x70] sm:$0xff]
    %v1255 = vld [vmem:[#allocation8 + $0x78] sm:$0xff]
    %v1256 = vld [vmem:[#allocation8 + $0x80] sm:$0xff]
    %v1257 = vld [vmem:[#allocation8 + $0x88] sm:$0xff]
    %v1258 = vld [vmem:[#allocation8 + $0x90] sm:$0xff]
    %v1259 = vld [vmem:[#allocation8 + $0x98] sm:$0xff]
    %v1260 = vld [vmem:[#allocation8 + $0xa0] sm:$0xff]
    %v1261 = vld [vmem:[#allocation8 + $0xa8] sm:$0xff]
    %v1262 = vld [vmem:[#allocation8 + $0xb0] sm:$0xff]
    %v1263 = vld [vmem:[#allocation8 + $0xb8] sm:$0xff]
    %v1264 = vld [vmem:[#allocation8 + $0xc0] sm:$0xff]
    %v1265 = vld [vmem:[#allocation8 + $0xc8] sm:$0xff]
    %v1266 = vld [vmem:[#allocation8 + $0xd0] sm:$0xff]
    %v1267 = vld [vmem:[#allocation8 + $0xd8] sm:$0xff]
    %v1268 = vld [vmem:[#allocation8 + $0xe0] sm:$0xff]
    %v1269 = vld [vmem:[#allocation8 + $0xe8] sm:$0xff]
    %v1270 = vld [vmem:[#allocation8 + $0xf0] sm:$0xff]
    %v1271 = vld [vmem:[#allocation8 + $0xf8] sm:$0xff]
    %v1272 = vld [vmem:[#allocation8 + $0x100] sm:$0xff]
    %v1273 = vld [vmem:[#allocation8 + $0x108] sm:$0xff]
    %v1274 = vld [vmem:[#allocation8 + $0x110] sm:$0xff]
    %v1275 = vld [vmem:[#allocation8 + $0x118] sm:$0xff]
    %v1276 = vld [vmem:[#allocation8 + $0x120] sm:$0xff]
    %v1277 = vld [vmem:[#allocation8 + $0x128] sm:$0xff]
    %v1278 = vld [vmem:[#allocation8 + $0x130] sm:$0xff]
    %v1279 = vld [vmem:[#allocation8 + $0x138] sm:$0xff]
    %v1280 = vld [vmem:[#allocation8 + $0x140] sm:$0xff]
    %v1281 = vld [vmem:[#allocation8 + $0x148] sm:$0xff]
    %v1282 = vld [vmem:[#allocation8 + $0x150] sm:$0xff]
    %v1283 = vld [vmem:[#allocation8 + $0x158] sm:$0xff]
    %v1284 = vld [vmem:[#allocation8 + $0x160] sm:$0xff]
    %v1285 = vld [vmem:[#allocation8 + $0x168] sm:$0xff]
    %v1286 = vld [vmem:[#allocation8 + $0x170] sm:$0xff]
    %v1287 = vld [vmem:[#allocation8 + $0x178] sm:$0xff]
    %v1288 = vld [vmem:[#allocation8 + $0x180] sm:$0xff]
    %v1289 = vld [vmem:[#allocation8 + $0x188] sm:$0xff]
    %v1290 = vld [vmem:[#allocation8 + $0x190] sm:$0xff]
    %v1291 = vld [vmem:[#allocation8 + $0x198] sm:$0xff]
    %v1292 = vld [vmem:[#allocation8 + $0x1a0] sm:$0xff]
    %v1293 = vld [vmem:[#allocation8 + $0x1a8] sm:$0xff]
    %v1294 = vld [vmem:[#allocation8 + $0x1b0] sm:$0xff]
    %v1295 = vld [vmem:[#allocation8 + $0x1b8] sm:$0xff]
    %v1296 = vld [vmem:[#allocation8 + $0x1c0] sm:$0xff]
    %v1297 = vld [vmem:[#allocation8 + $0x1c8] sm:$0xff]
    %v1298 = vld [vmem:[#allocation8 + $0x1d0] sm:$0xff]
    %v1299 = vld [vmem:[#allocation8 + $0x1d8] sm:$0xff]
    %v1300 = vld [vmem:[#allocation8 + $0x1e0] sm:$0xff]
    %v1301 = vld [vmem:[#allocation8 + $0x1e8] sm:$0xff]
    %v1302 = vld [vmem:[#allocation8 + $0x1f0] sm:$0xff]
    %v1303 = vld [vmem:[#allocation8 + $0x1f8] sm:$0xff]
    %v1304 = vld [vmem:[#allocation8 + $0x200] sm:$0xff]
    %v1305 = vld [vmem:[#allocation8 + $0x208] sm:$0xff]
    %v1306 = vld [vmem:[#allocation8 + $0x210] sm:$0xff]
    %v1307 = vld [vmem:[#allocation8 + $0x218] sm:$0xff]
    %v1308 = vld [vmem:[#allocation8 + $0x220] sm:$0xff]
    %v1309 = vld [vmem:[#allocation8 + $0x228] sm:$0xff]
    %v1310 = vld [vmem:[#allocation8 + $0x230] sm:$0xff]
    %v1311 = vld [vmem:[#allocation8 + $0x238] sm:$0xff]
    %v1312 = vld [vmem:[#allocation8 + $0x240] sm:$0xff]
    %v1313 = vld [vmem:[#allocation8 + $0x248] sm:$0xff]
    %v1314 = vld [vmem:[#allocation8 + $0x250] sm:$0xff]
    %v1315 = vld [vmem:[#allocation8 + $0x258] sm:$0xff]
    %v1316 = vld [vmem:[#allocation8 + $0x260] sm:$0xff]
    %v1317 = vld [vmem:[#allocation8 + $0x268] sm:$0xff]
    %v1318 = vld [vmem:[#allocation8 + $0x270] sm:$0xff]
    %v1319 = vld [vmem:[#allocation8 + $0x278] sm:$0xff]
    %v1320 = vld [vmem:[#allocation13] sm:$0x1]
    %v1322 = vperm.slane %v1320, 0
    %v1323 = vrot.slane %v214, 4
    %v1324 = vrot.slane %v625, 4
    %v1325 = vrot.slane %v213, 4
    %v1326 = vrot.slane %v624, 4
    %v1327 = vrot.slane %v217, 4
    %v1328 = vrot.slane %v628, 4
    %v1329 = vrot.slane %v216, 4
    %v1330 = vrot.slane %v627, 4
    %v1331 = vsel %vm286, %v202, %v1323
    %v1332 = vsel %vm286, %v221, %v1324
    %v1333 = vsel %vm286, %v1323, %v202
    %v1334 = vrot.slane %v1333, 4
    %v1335 = vsel %vm286, %v1324, %v221
    %v1336 = vrot.slane %v1335, 4
    %v1337 = vrot.slane %v1236, 4
    %v1338 = vsel %vm286, %v203, %v1325
    %v1339 = vsel %vm286, %v220, %v1326
    %v1340 = vsel %vm286, %v204, %v1327
    %v1341 = vsel %vm286, %v224, %v1328
    %v1342 = vsel %vm286, %v1327, %v204
    %v1343 = vrot.slane %v1342, 4
    %v1344 = vsel %vm286, %v1328, %v224
    %v1345 = vrot.slane %v1344, 4
    %v1346 = vrot.slane %v1239, 4
    %v1347 = vsel %vm286, %v205, %v1329
    %v1348 = vsel %vm286, %v223, %v1330
    %v1349 = vrot.slane %v1322, 4
    %1350 = vst [vmem:[#allocation1] ss:$2 sm:$0xff] %v1331
    %s1351 = scalar_lea.vmem [#allocation1], 1
    %1352 = vst [vmem:[%s1351] ss:$2 sm:$0xff] %v1334
    %s1353 = scalar_lea.vmem [#allocation1], 16
    %1354 = vst [vmem:[%s1353] ss:$2 sm:$0xff] %v1332
    %s1355 = scalar_lea.vmem [#allocation1], 17
    %1356 = vst [vmem:[%s1355] ss:$2 sm:$0xff] %v1336
    %s1357 = scalar_lea.vmem [#allocation1], 32
    %1358 = vst [vmem:[%s1357] ss:$2 sm:$0xff] %v1236
    %s1359 = scalar_lea.vmem [#allocation1], 33
    %1360 = vst [vmem:[%s1359] ss:$2 sm:$0xff] %v1337
    %s1361 = scalar_lea.vmem [#allocation1], 48
    %1362 = vst [vmem:[%s1361] ss:$2 sm:$0xff] %v1338
    %s1363 = scalar_lea.vmem [#allocation1], 49
    %1364 = vst [vmem:[%s1363] ss:$2 sm:$0xff] %v1340
    %v1365 = vld.sshfl [vmem:[#allocation1] sm:$0xff pattern:$0x75316420]
    %v1366 = vld.sshfl [vmem:[#allocation1 + $0x8] sm:$0xff pattern:$0x75316420]
    %v1367 = vld.sshfl [vmem:[#allocation1 + $0x10] sm:$0xff pattern:$0x75316420]
    %v1368 = vld.sshfl [vmem:[#allocation1 + $0x18] sm:$0xff pattern:$0x75316420]
    %v1369 = vld.sshfl [vmem:[#allocation1 + $0x20] sm:$0xff pattern:$0x75316420]
    %v1370 = vld.sshfl [vmem:[#allocation1 + $0x30] sm:$0xff pattern:$0x75316420]
    %v1371 = vld.sshfl [vmem:[#allocation1 + $0x38] sm:$0xff pattern:$0x75316420]
    %1372 = vst [vmem:[#allocation1] ss:$2 sm:$0xff] %v1339
    %1373 = vst [vmem:[%s1351] ss:$2 sm:$0xff] %v1341
    %1374 = vst [vmem:[%s1353] ss:$2 sm:$0xff] %v1235
    %1375 = vst [vmem:[%s1355] ss:$2 sm:$0xff] %v1239
    %1376 = vst [vmem:[%s1357] ss:$2 sm:$0xff] %v1343
    %1377 = vst [vmem:[%s1359] ss:$2 sm:$0xff] %v1347
    %1378 = vst [vmem:[%s1361] ss:$2 sm:$0xff] %v1345
    %1379 = vst [vmem:[%s1363] ss:$2 sm:$0xff] %v1348
    %v1380 = vld.sshfl [vmem:[#allocation1] sm:$0xff pattern:$0x75316420]
    %v1381 = vld.sshfl [vmem:[#allocation1 + $0x8] sm:$0xff pattern:$0x75316420]
    %v1382 = vld.sshfl [vmem:[#allocation1 + $0x10] sm:$0xff pattern:$0x75316420]
    %v1383 = vld.sshfl [vmem:[#allocation1 + $0x20] sm:$0xff pattern:$0x75316420]
    %v1384 = vld.sshfl [vmem:[#allocation1 + $0x28] sm:$0xff pattern:$0x75316420]
    %v1385 = vld.sshfl [vmem:[#allocation1 + $0x30] sm:$0xff pattern:$0x75316420]
    %v1386 = vld.sshfl [vmem:[#allocation1 + $0x38] sm:$0xff pattern:$0x75316420]
    %1387 = vst [vmem:[#allocation1] ss:$2 sm:$0xff] %v1346
    %1388 = vst [vmem:[%s1351] ss:$2 sm:$0xff] %v1238
    %v1389 = vld.sshfl [vmem:[#allocation1] sm:$0xff pattern:$0x75316420]
    %1405 = vst [vmem:[#allocation1] ss:$2 sm:$0xff] %v1322
    %s1406 = scalar_lea.vmem [#allocation1], 1
    %1407 = vst [vmem:[%s1406] ss:$2 sm:$0xff] %v1349
    %s1408 = scalar_lea.vmem [#allocation1], 16
    %1409 = vst [vmem:[%s1408] ss:$2 sm:$0xff] %v1322
    %s1410 = scalar_lea.vmem [#allocation1], 17
    %1411 = vst [vmem:[%s1410] ss:$2 sm:$0xff] %v1322
    %s1412 = scalar_lea.vmem [#allocation1], 32
    %1413 = vst [vmem:[%s1412] ss:$2 sm:$0xff] %v1349
    %s1414 = scalar_lea.vmem [#allocation1], 33
    %1415 = vst [vmem:[%s1414] ss:$2 sm:$0xff] %v1322
    %v1416 = vld.sshfl [vmem:[#allocation1] sm:$0xff pattern:$0x75316420]
    %v1417 = vld.sshfl [vmem:[#allocation1 + $0x10] sm:$0xff pattern:$0x75316420]
    %v1418 = vld.sshfl [vmem:[#allocation1 + $0x20] sm:$0xff pattern:$0x75316420]
    %1422 = vmatpush.msra.mxu0 %v1255
    %1423 = vmatpush.msra.mxu0 %v1254
    %1424 = vmatpush.msra.mxu0 %v1253
    %1425 = vmatpush.msra.mxu0 %v1252
    %1426 = vmatpush.msra.mxu0 %v1251
    %1427 = vmatpush.msra.mxu0 %v1250
    %1428 = vmatpush.msra.mxu0 %v1249
    %1429 = vmatpush.msra.mxu0 %v1248
    %1430 = vmatpush.msra.mxu0 %v1247
    %1431 = vmatpush.msra.mxu0 %v1246
    %1432 = vmatpush.msra.mxu0 %v1245
    %1433 = vmatpush.msra.mxu0 %v1244
    %1434 = vmatpush.msra.mxu0 %v1243
    %1435 = vmatpush.msra.mxu0 %v1242
    %1436 = vmatpush.msra.mxu0 %v1241
    %1437 = vmatpush.msra.mxu0 %v1240
    %1438 = vmatmul.f32.gmra.mxu0 %v1365
    %v1439 = vpop.f32.mrf.mxu0
    %v1440 = vadd.f32 %v1416, %v1439
    %1441 = vmatmul.f32.gmra.mxu0 %v1370
    %v1442 = vpop.f32.mrf.mxu0
    %v1443 = vadd.f32 %v1417, %v1442
    %1444 = vmatmul.f32.gmra.mxu0 %v1383
    %v1445 = vpop.f32.mrf.mxu0
    %v1446 = vadd.f32 %v1418, %v1445
    %1447 = vdwg.mxu0
    %1448 = vmatpush.msra.mxu0 %v1271
    %1449 = vmatpush.msra.mxu0 %v1270
    %1450 = vmatpush.msra.mxu0 %v1269
    %1451 = vmatpush.msra.mxu0 %v1268
    %1452 = vmatpush.msra.mxu0 %v1267
    %1453 = vmatpush.msra.mxu0 %v1266
    %1454 = vmatpush.msra.mxu0 %v1265
    %1455 = vmatpush.msra.mxu0 %v1264
    %1456 = vmatpush.msra.mxu0 %v1263
    %1457 = vmatpush.msra.mxu0 %v1262
    %1458 = vmatpush.msra.mxu0 %v1261
    %1459 = vmatpush.msra.mxu0 %v1260
    %1460 = vmatpush.msra.mxu0 %v1259
    %1461 = vmatpush.msra.mxu0 %v1258
    %1462 = vmatpush.msra.mxu0 %v1257
    %1463 = vmatpush.msra.mxu0 %v1256
    %1464 = vmatmul.f32.gmra.mxu0 %v1366
    %v1465 = vpop.f32.mrf.mxu0
    %v1466 = vadd.f32 %v1440, %v1465
    %1467 = vmatmul.f32.gmra.mxu0 %v1371
    %v1468 = vpop.f32.mrf.mxu0
    %v1469 = vadd.f32 %v1443, %v1468
    %1470 = vmatmul.f32.gmra.mxu0 %v1384
    %v1471 = vpop.f32.mrf.mxu0
    %v1472 = vadd.f32 %v1446, %v1471
    %1473 = vdwg.mxu0
    %1474 = vmatpush.msra.mxu0 %v1287
    %1475 = vmatpush.msra.mxu0 %v1286
    %1476 = vmatpush.msra.mxu0 %v1285
    %1477 = vmatpush.msra.mxu0 %v1284
    %1478 = vmatpush.msra.mxu0 %v1283
    %1479 = vmatpush.msra.mxu0 %v1282
    %1480 = vmatpush.msra.mxu0 %v1281
    %1481 = vmatpush.msra.mxu0 %v1280
    %1482 = vmatpush.msra.mxu0 %v1279
    %1483 = vmatpush.msra.mxu0 %v1278
    %1484 = vmatpush.msra.mxu0 %v1277
    %1485 = vmatpush.msra.mxu0 %v1276
    %1486 = vmatpush.msra.mxu0 %v1275
    %1487 = vmatpush.msra.mxu0 %v1274
    %1488 = vmatpush.msra.mxu0 %v1273
    %1489 = vmatpush.msra.mxu0 %v1272
    %1490 = vmatmul.f32.gmra.mxu0 %v1367
    %v1491 = vpop.f32.mrf.mxu0
    %v1492 = vadd.f32 %v1466, %v1491
    %1493 = vmatmul.f32.gmra.mxu0 %v1380
    %v1494 = vpop.f32.mrf.mxu0
    %v1495 = vadd.f32 %v1469, %v1494
    %1496 = vmatmul.f32.gmra.mxu0 %v1385
    %v1497 = vpop.f32.mrf.mxu0
    %v1498 = vadd.f32 %v1472, %v1497
    %1499 = vdwg.mxu0
    %1500 = vmatpush.msra.mxu0 %v1303
    %1501 = vmatpush.msra.mxu0 %v1302
    %1502 = vmatpush.msra.mxu0 %v1301
    %1503 = vmatpush.msra.mxu0 %v1300
    %1504 = vmatpush.msra.mxu0 %v1299
    %1505 = vmatpush.msra.mxu0 %v1298
    %1506 = vmatpush.msra.mxu0 %v1297
    %1507 = vmatpush.msra.mxu0 %v1296
    %1508 = vmatpush.msra.mxu0 %v1295
    %1509 = vmatpush.msra.mxu0 %v1294
    %1510 = vmatpush.msra.mxu0 %v1293
    %1511 = vmatpush.msra.mxu0 %v1292
    %1512 = vmatpush.msra.mxu0 %v1291
    %1513 = vmatpush.msra.mxu0 %v1290
    %1514 = vmatpush.msra.mxu0 %v1289
    %1515 = vmatpush.msra.mxu0 %v1288
    %1516 = vmatmul.f32.gmra.mxu0 %v1368
    %v1517 = vpop.f32.mrf.mxu0
    %v1518 = vadd.f32 %v1492, %v1517
    %1519 = vmatmul.f32.gmra.mxu0 %v1381
    %v1520 = vpop.f32.mrf.mxu0
    %v1521 = vadd.f32 %v1495, %v1520
    %1522 = vmatmul.f32.gmra.mxu0 %v1386
    %v1523 = vpop.f32.mrf.mxu0
    %v1524 = vadd.f32 %v1498, %v1523
    %1525 = vdwg.mxu0
    %1526 = vmatpush.msra.mxu0 %v1319
    %1527 = vmatpush.msra.mxu0 %v1318
    %1528 = vmatpush.msra.mxu0 %v1317
    %1529 = vmatpush.msra.mxu0 %v1316
    %1530 = vmatpush.msra.mxu0 %v1315
    %1531 = vmatpush.msra.mxu0 %v1314
    %1532 = vmatpush.msra.mxu0 %v1313
    %1533 = vmatpush.msra.mxu0 %v1312
    %1534 = vmatpush.msra.mxu0 %v1311
    %1535 = vmatpush.msra.mxu0 %v1310
    %1536 = vmatpush.msra.mxu0 %v1309
    %1537 = vmatpush.msra.mxu0 %v1308
    %1538 = vmatpush.msra.mxu0 %v1307
    %1539 = vmatpush.msra.mxu0 %v1306
    %1540 = vmatpush.msra.mxu0 %v1305
    %1541 = vmatpush.msra.mxu0 %v1304
    %1542 = vmatmul.f32.gmra.mxu0 %v1369
    %v1543 = vpop.f32.mrf.mxu0
    %v1544 = vadd.f32 %v1518, %v1543
    %1545 = vmatmul.f32.gmra.mxu0 %v1382
    %v1546 = vpop.f32.mrf.mxu0
    %v1547 = vadd.f32 %v1521, %v1546
    %1548 = vmatmul.f32.gmra.mxu0 %v1389
    %v1549 = vpop.f32.mrf.mxu0
    %v1550 = vadd.f32 %v1524, %v1549
    %1551 = vdwg.mxu0
    %v1555 = vrot.slane %v1544, 4
    %v1556 = vrot.slane %v1547, 4
    %v1557 = vrot.slane %v1550, 4
    %v1561 = vmax.f32 %v1544, 0.0
    %v1562 = vmax.f32 %v1555, 0.0
    %v1563 = vmax.f32 %v1547, 0.0
    %v1564 = vmax.f32 %v1556, 0.0
    %v1565 = vmax.f32 %v1550, 0.0
    %v1566 = vmax.f32 %v1557, 0.0
    %1573 = vst [vmem:[#allocation1] ss:$2 sm:$0xff] %v1561
    %s1574 = scalar_lea.vmem [#allocation1], 1
    %1575 = vst [vmem:[%s1574] ss:$2 sm:$0xff] %v1562
    %s1576 = scalar_lea.vmem [#allocation1], 16
    %1577 = vst [vmem:[%s1576] ss:$2 sm:$0xff] %v1563
    %v1578 = vld.sshfl [vmem:[#allocation1] sm:$0xff pattern:$0x75316420]
    %v1579 = vld.sshfl [vmem:[#allocation1 + $0x10] sm:$0xff pattern:$0x75316420]
    %s1580 = scalar_lea.vmem [#allocation1], 32
    %1581 = vst [vmem:[%s1580] ss:$2 sm:$0xff] %v1564
    %s1582 = scalar_lea.vmem [#allocation1], 33
    %1583 = vst [vmem:[%s1582] ss:$2 sm:$0xff] %v1565
    %s1584 = scalar_lea.vmem [#allocation1], 48
    %1585 = vst [vmem:[%s1584] ss:$2 sm:$0xff] %v1566
    %v1586 = vld.sshfl [vmem:[#allocation1 + $0x20] sm:$0xff pattern:$0x75316420]
    %v1587 = vld.sshfl [vmem:[#allocation1 + $0x30] sm:$0xff pattern:$0x75316420]
    %v1592 = vsel %vm571, %v1578, -inf
    %vm1593 = vcmask 60416
    %v1594 = vsel %vm1593, %v1579, -inf
    %v1595 = vmax.f32 %v1592, %v1594
    %v1596 = vrot.slane %v1595, 4
    %v1597 = vmax.f32 %v1595, %v1596
    %v1598 = vrot.slane %v1597, 2
    %v1599 = vmax.f32 %v1597, %v1598
    %v1600 = vrot.slane %v1599, 1
    %v1601 = vmax.f32 %v1599, %v1600
    %v1602 = vsel %vm571, %v1586, -inf
    %v1603 = vsel %vm1593, %v1587, -inf
    %v1604 = vmax.f32 %v1602, %v1603
    %v1605 = vrot.slane %v1604, 4
    %v1606 = vmax.f32 %v1604, %v1605
    %v1607 = vrot.slane %v1606, 2
    %v1608 = vmax.f32 %v1606, %v1607
    %v1609 = vrot.slane %v1608, 1
    %v1610 = vmax.f32 %v1608, %v1609
    %v1611 = vld [vmem:[%s13] sm:$0xff]
    %v1614 = vsel %vm594, %v1610, %v1601
    %v1615 = vsel %vm571, %v1614, 0
    %1617 = vmatpush.msra.mxu0 0.0
    %1618 = vmatpush.msra.mxu0 0.0
    %1619 = vmatpush.msra.mxu0 0.0
    %1620 = vmatpush.msra.mxu0 0.0
    %1621 = vmatpush.msra.mxu0 0.0
    %1622 = vmatpush.msra.mxu0 0.0
    %1623 = vmatpush.msra.mxu0 0.0
    %1624 = vmatpush.msra.mxu0 0.0
    %1625 = vmatpush.msra.mxu0 0.0
    %1626 = vmatpush.msra.mxu0 0.0
    %1627 = vmatpush.msra.mxu0 0.0
    %1628 = vmatpush.msra.mxu0 0.0
    %1629 = vmatpush.msra.mxu0 0.0
    %1630 = vmatpush.msra.mxu0 0.0
    %1631 = vmatpush.msra.mxu0 0.0
    %1632 = vmatpush.msra.mxu0 %v1611
    %1633 = vmatmul.f32.gmra.mxu0 %v1615
    %v1634 = vpop.f32.mrf.mxu0
    %v1635 = vadd.f32 0.0, %v1634
    %1636 = vdwg.mxu0
    %v1637 = vadd.f32 %v1233, %v1635
    %v1638 = vld [vmem:[%s1] sm:$0xff]
    %v1639 = vld [vmem:[%s1 + $0x8] sm:$0xff]
    %v1640 = vld [vmem:[#allocation14] sm:$0x1]
    %1642 = vset.pattern.permute.xlu0 0
    %1643 = vperm.xlu0 %1642, %v1638
    %v1644 = vpop.permute.xlu0 %1643
    %1647 = vset.pattern.permute.xlu0 0
    %1648 = vperm.xlu0 %1647, %v1639
    %v1649 = vpop.permute.xlu0 %1648
    %v1652 = vperm.slane %v1640, 0
    %v1654 = vmul.f32 %v1644, %v1652
    %v1655 = vmul.f32 %v1649, %v1652
    %v1656 = vld [vmem:[%s10] sm:$0x1]
    %v1658 = vperm.slane %v1656, 0
    %v1660 = vadd.f32 %v1654, %v1658
    %v1661 = vadd.f32 %v1655, %v1658
    %v1662 = vld [vmem:[#allocation16] sm:$0xff]
    %v1663 = vld [vmem:[#allocation16 + $0x8] sm:$0xff]
    %v1664 = vld [vmem:[#allocation16 + $0x10] sm:$0xff]
    %v1665 = vld [vmem:[#allocation16 + $0x18] sm:$0xff]
    %vm1666 = vcmask 261120
    %v1668 = vsel %vm1666, 0.0, 0
    %1670 = vmatpush.msra.mxu0 0.0
    %1671 = vmatpush.msra.mxu0 0.0
    %1672 = vmatpush.msra.mxu0 0.0
    %1673 = vmatpush.msra.mxu0 0.0
    %1674 = vmatpush.msra.mxu0 0.0
    %1675 = vmatpush.msra.mxu0 0.0
    %1676 = vmatpush.msra.mxu0 0.0
    %1677 = vmatpush.msra.mxu0 0.0
    %1678 = vmatpush.msra.mxu0 0.0
    %1679 = vmatpush.msra.mxu0 0.0
    %1680 = vmatpush.msra.mxu0 0.0
    %1681 = vmatpush.msra.mxu0 0.0
    %1682 = vmatpush.msra.mxu0 %v1665
    %1683 = vmatpush.msra.mxu0 %v1664
    %1684 = vmatpush.msra.mxu0 %v1663
    %1685 = vmatpush.msra.mxu0 %v1662
    %1686 = vmatmul.f32.gmra.mxu0 %v1668
    %v1687 = vpop.f32.mrf.mxu0
    %v1688 = vadd.f32 0.0, %v1687
    %1689 = vdwg.mxu0
    %v1691 = vrot.slane %v1688, 1
    %v1694 = vadd.f32 %v1660, %v1688
    %v1695 = vadd.f32 %v1661, %v1691
    %v1696 = vxor.u32 %v1694, 2147483648
    %v1697 = vxor.u32 %v1695, 2147483648
    %v1698 = vmul.f32 %v1696, 1.442695
    %v1699 = vpow.pop %v1698
    %v1700 = vmul.f32 %v1697, 1.442695
    %v1701 = vpow.pop %v1700
    %v1702 = vadd.f32 %v1699, 1.0
    %v1703 = vadd.f32 %v1701, 1.0
    %v1704 = vrcp.pop %v1702
    %v1705 = vmul.f32 %v1702, %v1704
    %v1706 = vsub.f32 1.0, %v1705
    %v1707 = vmul.f32 %v1704, %v1706
    %v1708 = vadd.f32 %v1704, %v1707
    %vm1709 = vweird.f32 %v1702
    %vm1710 = vweird.f32 %v1704
    %vm1711 = vmor %vm1709, %vm1710
    %v1712 = vsel %vm1711, %v1704, %v1708
    %v1713 = vand.u32 2147483647, %v1702
    %vm1714 = vcmp.eq.f32.partialorder %v1713, 8.507059e+37
    %v1715 = vand.u32 %v1702, 2147483648
    %v1716 = vor.u32 1.1754944e-38, %v1715
    %v1717 = vsel %vm1714, %v1716, %v1712
    %v1718 = vmul.f32 1.0, %v1717
    %v1719 = vrcp.pop %v1703
    %v1720 = vmul.f32 %v1703, %v1719
    %v1721 = vsub.f32 1.0, %v1720
    %v1722 = vmul.f32 %v1719, %v1721
    %v1723 = vadd.f32 %v1719, %v1722
    %vm1724 = vweird.f32 %v1703
    %vm1725 = vweird.f32 %v1719
    %vm1726 = vmor %vm1724, %vm1725
    %v1727 = vsel %vm1726, %v1719, %v1723
    %v1728 = vand.u32 2147483647, %v1703
    %vm1729 = vcmp.eq.f32.partialorder %v1728, 8.507059e+37
    %v1730 = vand.u32 %v1703, 2147483648
    %v1731 = vor.u32 1.1754944e-38, %v1730
    %v1732 = vsel %vm1729, %v1731, %v1727
    %v1733 = vmul.f32 1.0, %v1732
    %v1734 = vtanh.pop %v1694
    %v1735 = vtanh.pop %v1695
    %v1736 = vmul.f32 %v1718, 0.0
    %v1737 = vmul.f32 %v1733, 0.0
    %1740 = vrot.lane.b32.xlu0 %v1734, 64
    %v1741 = vpop.permute.xlu0 %1740
    %1742 = vrot.lane.b32.xlu0 %v1735, 64
    %v1743 = vpop.permute.xlu0 %1742
    %v1746 = vmul.f32 %v1718, %v1741
    %v1747 = vmul.f32 %v1733, %v1743
    %1750 = vrot.lane.b32.xlu0 %v1746, 32
    %v1751 = vpop.permute.xlu0 %1750
    %1752 = vrot.lane.b32.xlu0 %v1747, 32
    %v1753 = vpop.permute.xlu0 %1752
    %v1756 = vadd.f32 %v1736, %v1751
    %v1757 = vadd.f32 %v1737, %v1753
    %v1758 = vtanh.pop %v1756
    %v1759 = vtanh.pop %v1757
    %1762 = vrot.lane.b32.xlu0 %v1758, 64
    %v1763 = vpop.permute.xlu0 %1762
    %1764 = vrot.lane.b32.xlu0 %v1759, 64
    %v1765 = vpop.permute.xlu0 %1764
    %v1768 = vmul.f32 %v1718, %v1763
    %v1769 = vmul.f32 %v1733, %v1765
    %v1772 = vrot.slane %v1769, 7
    %v1773 = vsel %vm594, %v1772, %v1768
    %1774 = vrot.lane.b32.xlu0 %v1773, 32
    %v1775 = vpop.permute.xlu0 %1774
    %v1776 = vsel %vm1666, %v1775, 0
    %1778 = vmatpush.msra.mxu0 0.0
    %1779 = vmatpush.msra.mxu0 0.0
    %1780 = vmatpush.msra.mxu0 0.0
    %1781 = vmatpush.msra.mxu0 0.0
    %1782 = vmatpush.msra.mxu0 0.0
    %1783 = vmatpush.msra.mxu0 0.0
    %1784 = vmatpush.msra.mxu0 0.0
    %1785 = vmatpush.msra.mxu0 0.0
    %1786 = vmatpush.msra.mxu0 0.0
    %1787 = vmatpush.msra.mxu0 0.0
    %1788 = vmatpush.msra.mxu0 0.0
    %1789 = vmatpush.msra.mxu0 0.0
    %1790 = vmatpush.msra.mxu0 %v1665
    %1791 = vmatpush.msra.mxu0 %v1664
    %1792 = vmatpush.msra.mxu0 %v1663
    %1793 = vmatpush.msra.mxu0 %v1662
    %1794 = vmatmul.f32.gmra.mxu0 %v1776
    %v1795 = vpop.f32.mrf.mxu0
    %v1796 = vadd.f32 0.0, %v1795
    %1797 = vdwg.mxu0
    %v1799 = vrot.slane %v1796, 7
    %v1802 = vadd.f32 %v1660, %v1799
    %v1803 = vadd.f32 %v1661, %v1796
    %v1804 = vxor.u32 %v1802, 2147483648
    %v1805 = vxor.u32 %v1803, 2147483648
    %v1806 = vmul.f32 %v1804, 1.442695
    %v1807 = vpow.pop %v1806
    %v1808 = vmul.f32 %v1805, 1.442695
    %v1809 = vpow.pop %v1808
    %v1810 = vadd.f32 %v1807, 1.0
    %v1811 = vadd.f32 %v1809, 1.0
    %v1812 = vrcp.pop %v1810
    %v1813 = vmul.f32 %v1810, %v1812
    %v1814 = vsub.f32 1.0, %v1813
    %v1815 = vmul.f32 %v1812, %v1814
    %v1816 = vadd.f32 %v1812, %v1815
    %vm1817 = vweird.f32 %v1810
    %vm1818 = vweird.f32 %v1812
    %vm1819 = vmor %vm1817, %vm1818
    %v1820 = vsel %vm1819, %v1812, %v1816
    %v1821 = vand.u32 2147483647, %v1810
    %vm1822 = vcmp.eq.f32.partialorder %v1821, 8.507059e+37
    %v1823 = vand.u32 %v1810, 2147483648
    %v1824 = vor.u32 1.1754944e-38, %v1823
    %v1825 = vsel %vm1822, %v1824, %v1820
    %v1826 = vmul.f32 1.0, %v1825
    %v1827 = vrcp.pop %v1811
    %v1828 = vmul.f32 %v1811, %v1827
    %v1829 = vsub.f32 1.0, %v1828
    %v1830 = vmul.f32 %v1827, %v1829
    %v1831 = vadd.f32 %v1827, %v1830
    %vm1832 = vweird.f32 %v1811
    %vm1833 = vweird.f32 %v1827
    %vm1834 = vmor %vm1832, %vm1833
    %v1835 = vsel %vm1834, %v1827, %v1831
    %v1836 = vand.u32 2147483647, %v1811
    %vm1837 = vcmp.eq.f32.partialorder %v1836, 8.507059e+37
    %v1838 = vand.u32 %v1811, 2147483648
    %v1839 = vor.u32 1.1754944e-38, %v1838
    %v1840 = vsel %vm1837, %v1839, %v1835
    %v1841 = vmul.f32 1.0, %v1840
    %v1842 = vtanh.pop %v1802
    %v1843 = vtanh.pop %v1803
    %v1846 = vrot.slane %v1756, 7
    %v1847 = vrot.slane %v1757, 7
    %v1850 = vmul.f32 %v1826, %v1846
    %v1851 = vmul.f32 %v1841, %v1847
    %1854 = vrot.lane.b32.xlu0 %v1842, 64
    %v1855 = vpop.permute.xlu0 %1854
    %1856 = vrot.lane.b32.xlu0 %v1843, 64
    %v1857 = vpop.permute.xlu0 %1856
    %v1860 = vmul.f32 %v1826, %v1855
    %v1861 = vmul.f32 %v1841, %v1857
    %1864 = vrot.lane.b32.xlu0 %v1860, 32
    %v1865 = vpop.permute.xlu0 %1864
    %1866 = vrot.lane.b32.xlu0 %v1861, 32
    %v1867 = vpop.permute.xlu0 %1866
    %v1870 = vadd.f32 %v1850, %v1865
    %v1871 = vadd.f32 %v1851, %v1867
    %v1872 = vtanh.pop %v1870
    %v1873 = vtanh.pop %v1871
    %1876 = vrot.lane.b32.xlu0 %v1872, 64
    %v1877 = vpop.permute.xlu0 %1876
    %1878 = vrot.lane.b32.xlu0 %v1873, 64
    %v1879 = vpop.permute.xlu0 %1878
    %v1882 = vmul.f32 %v1826, %v1877
    %v1883 = vmul.f32 %v1841, %v1879
    %v1886 = vrot.slane %v1882, 1
    %v1887 = vsel %vm594, %v1883, %v1886
    %1888 = vrot.lane.b32.xlu0 %v1887, 32
    %v1889 = vpop.permute.xlu0 %1888
    %v1890 = vsel %vm1666, %v1889, 0
    %1892 = vmatpush.msra.mxu0 0.0
    %1893 = vmatpush.msra.mxu0 0.0
    %1894 = vmatpush.msra.mxu0 0.0
    %1895 = vmatpush.msra.mxu0 0.0
    %1896 = vmatpush.msra.mxu0 0.0
    %1897 = vmatpush.msra.mxu0 0.0
    %1898 = vmatpush.msra.mxu0 0.0
    %1899 = vmatpush.msra.mxu0 0.0
    %1900 = vmatpush.msra.mxu0 0.0
    %1901 = vmatpush.msra.mxu0 0.0
    %1902 = vmatpush.msra.mxu0 0.0
    %1903 = vmatpush.msra.mxu0 0.0
    %1904 = vmatpush.msra.mxu0 %v1665
    %1905 = vmatpush.msra.mxu0 %v1664
    %1906 = vmatpush.msra.mxu0 %v1663
    %1907 = vmatpush.msra.mxu0 %v1662
    %1908 = vmatmul.f32.gmra.mxu0 %v1890
    %v1909 = vpop.f32.mrf.mxu0
    %v1910 = vadd.f32 0.0, %v1909
    %1911 = vdwg.mxu0
    %v1913 = vrot.slane %v1910, 6
    %v1914 = vrot.slane %v1910, 7
    %v1917 = vadd.f32 %v1660, %v1913
    %v1918 = vadd.f32 %v1661, %v1914
    %v1919 = vxor.u32 %v1917, 2147483648
    %v1920 = vxor.u32 %v1918, 2147483648
    %v1921 = vmul.f32 %v1919, 1.442695
    %v1922 = vpow.pop %v1921
    %v1923 = vmul.f32 %v1920, 1.442695
    %v1924 = vpow.pop %v1923
    %v1925 = vadd.f32 %v1922, 1.0
    %v1926 = vadd.f32 %v1924, 1.0
    %v1927 = vrcp.pop %v1925
    %v1928 = vmul.f32 %v1925, %v1927
    %v1929 = vsub.f32 1.0, %v1928
    %v1930 = vmul.f32 %v1927, %v1929
    %v1931 = vadd.f32 %v1927, %v1930
    %vm1932 = vweird.f32 %v1925
    %vm1933 = vweird.f32 %v1927
    %vm1934 = vmor %vm1932, %vm1933
    %v1935 = vsel %vm1934, %v1927, %v1931
    %v1936 = vand.u32 2147483647, %v1925
    %vm1937 = vcmp.eq.f32.partialorder %v1936, 8.507059e+37
    %v1938 = vand.u32 %v1925, 2147483648
    %v1939 = vor.u32 1.1754944e-38, %v1938
    %v1940 = vsel %vm1937, %v1939, %v1935
    %v1941 = vmul.f32 1.0, %v1940
    %v1942 = vrcp.pop %v1926
    %v1943 = vmul.f32 %v1926, %v1942
    %v1944 = vsub.f32 1.0, %v1943
    %v1945 = vmul.f32 %v1942, %v1944
    %v1946 = vadd.f32 %v1942, %v1945
    %vm1947 = vweird.f32 %v1926
    %vm1948 = vweird.f32 %v1942
    %vm1949 = vmor %vm1947, %vm1948
    %v1950 = vsel %vm1949, %v1942, %v1946
    %v1951 = vand.u32 2147483647, %v1926
    %vm1952 = vcmp.eq.f32.partialorder %v1951, 8.507059e+37
    %v1953 = vand.u32 %v1926, 2147483648
    %v1954 = vor.u32 1.1754944e-38, %v1953
    %v1955 = vsel %vm1952, %v1954, %v1950
    %v1956 = vmul.f32 1.0, %v1955
    %v1957 = vtanh.pop %v1917
    %v1958 = vtanh.pop %v1918
    %v1961 = vrot.slane %v1870, 7
    %v1962 = vrot.slane %v1871, 7
    %v1965 = vmul.f32 %v1941, %v1961
    %v1966 = vmul.f32 %v1956, %v1962
    %1969 = vrot.lane.b32.xlu0 %v1957, 64
    %v1970 = vpop.permute.xlu0 %1969
    %1971 = vrot.lane.b32.xlu0 %v1958, 64
    %v1972 = vpop.permute.xlu0 %1971
    %v1975 = vmul.f32 %v1941, %v1970
    %v1976 = vmul.f32 %v1956, %v1972
    %1979 = vrot.lane.b32.xlu0 %v1975, 32
    %v1980 = vpop.permute.xlu0 %1979
    %1981 = vrot.lane.b32.xlu0 %v1976, 32
    %v1982 = vpop.permute.xlu0 %1981
    %v1985 = vadd.f32 %v1965, %v1980
    %v1986 = vadd.f32 %v1966, %v1982
    %v1987 = vtanh.pop %v1985
    %v1988 = vtanh.pop %v1986
    %1991 = vrot.lane.b32.xlu0 %v1987, 64
    %v1992 = vpop.permute.xlu0 %1991
    %1993 = vrot.lane.b32.xlu0 %v1988, 64
    %v1994 = vpop.permute.xlu0 %1993
    %v1997 = vmul.f32 %v1941, %v1992
    %v1998 = vmul.f32 %v1956, %v1994
    %v2001 = vrot.slane %v1997, 2
    %v2002 = vrot.slane %v1998, 1
    %v2003 = vsel %vm594, %v2002, %v2001
    %2004 = vrot.lane.b32.xlu0 %v2003, 32
    %v2005 = vpop.permute.xlu0 %2004
    %v2006 = vsel %vm1666, %v2005, 0
    %2008 = vmatpush.msra.mxu0 0.0
    %2009 = vmatpush.msra.mxu0 0.0
    %2010 = vmatpush.msra.mxu0 0.0
    %2011 = vmatpush.msra.mxu0 0.0
    %2012 = vmatpush.msra.mxu0 0.0
    %2013 = vmatpush.msra.mxu0 0.0
    %2014 = vmatpush.msra.mxu0 0.0
    %2015 = vmatpush.msra.mxu0 0.0
    %2016 = vmatpush.msra.mxu0 0.0
    %2017 = vmatpush.msra.mxu0 0.0
    %2018 = vmatpush.msra.mxu0 0.0
    %2019 = vmatpush.msra.mxu0 0.0
    %2020 = vmatpush.msra.mxu0 %v1665
    %2021 = vmatpush.msra.mxu0 %v1664
    %2022 = vmatpush.msra.mxu0 %v1663
    %2023 = vmatpush.msra.mxu0 %v1662
    %2024 = vmatmul.f32.gmra.mxu0 %v2006
    %v2025 = vpop.f32.mrf.mxu0
    %v2026 = vadd.f32 0.0, %v2025
    %2027 = vdwg.mxu0
    %v2029 = vrot.slane %v2026, 5
    %v2030 = vrot.slane %v2026, 6
    %v2033 = vadd.f32 %v1660, %v2029
    %v2034 = vadd.f32 %v1661, %v2030
    %v2035 = vxor.u32 %v2033, 2147483648
    %v2036 = vxor.u32 %v2034, 2147483648
    %v2037 = vmul.f32 %v2035, 1.442695
    %v2038 = vpow.pop %v2037
    %v2039 = vmul.f32 %v2036, 1.442695
    %v2040 = vpow.pop %v2039
    %v2041 = vadd.f32 %v2038, 1.0
    %v2042 = vadd.f32 %v2040, 1.0
    %v2043 = vrcp.pop %v2041
    %v2044 = vmul.f32 %v2041, %v2043
    %v2045 = vsub.f32 1.0, %v2044
    %v2046 = vmul.f32 %v2043, %v2045
    %v2047 = vadd.f32 %v2043, %v2046
    %vm2048 = vweird.f32 %v2041
    %vm2049 = vweird.f32 %v2043
    %vm2050 = vmor %vm2048, %vm2049
    %v2051 = vsel %vm2050, %v2043, %v2047
    %v2052 = vand.u32 2147483647, %v2041
    %vm2053 = vcmp.eq.f32.partialorder %v2052, 8.507059e+37
    %v2054 = vand.u32 %v2041, 2147483648
    %v2055 = vor.u32 1.1754944e-38, %v2054
    %v2056 = vsel %vm2053, %v2055, %v2051
    %v2057 = vmul.f32 1.0, %v2056
    %v2058 = vrcp.pop %v2042
    %v2059 = vmul.f32 %v2042, %v2058
    %v2060 = vsub.f32 1.0, %v2059
    %v2061 = vmul.f32 %v2058, %v2060
    %v2062 = vadd.f32 %v2058, %v2061
    %vm2063 = vweird.f32 %v2042
    %vm2064 = vweird.f32 %v2058
    %vm2065 = vmor %vm2063, %vm2064
    %v2066 = vsel %vm2065, %v2058, %v2062
    %v2067 = vand.u32 2147483647, %v2042
    %vm2068 = vcmp.eq.f32.partialorder %v2067, 8.507059e+37
    %v2069 = vand.u32 %v2042, 2147483648
    %v2070 = vor.u32 1.1754944e-38, %v2069
    %v2071 = vsel %vm2068, %v2070, %v2066
    %v2072 = vmul.f32 1.0, %v2071
    %v2073 = vtanh.pop %v2033
    %v2074 = vtanh.pop %v2034
    %v2077 = vrot.slane %v1985, 7
    %v2078 = vrot.slane %v1986, 7
    %v2081 = vmul.f32 %v2057, %v2077
    %v2082 = vmul.f32 %v2072, %v2078
    %2085 = vrot.lane.b32.xlu0 %v2073, 64
    %v2086 = vpop.permute.xlu0 %2085
    %2087 = vrot.lane.b32.xlu0 %v2074, 64
    %v2088 = vpop.permute.xlu0 %2087
    %v2091 = vmul.f32 %v2057, %v2086
    %v2092 = vmul.f32 %v2072, %v2088
    %2095 = vrot.lane.b32.xlu0 %v2091, 32
    %v2096 = vpop.permute.xlu0 %2095
    %2097 = vrot.lane.b32.xlu0 %v2092, 32
    %v2098 = vpop.permute.xlu0 %2097
    %v2101 = vadd.f32 %v2081, %v2096
    %v2102 = vadd.f32 %v2082, %v2098
    %v2103 = vtanh.pop %v2101
    %v2104 = vtanh.pop %v2102
    %2107 = vrot.lane.b32.xlu0 %v2103, 64
    %v2108 = vpop.permute.xlu0 %2107
    %2109 = vrot.lane.b32.xlu0 %v2104, 64
    %v2110 = vpop.permute.xlu0 %2109
    %v2113 = vmul.f32 %v2057, %v2108
    %v2114 = vmul.f32 %v2072, %v2110
    %v2117 = vrot.slane %v2113, 3
    %v2118 = vrot.slane %v2114, 2
    %v2119 = vsel %vm594, %v2118, %v2117
    %2120 = vrot.lane.b32.xlu0 %v2119, 32
    %v2121 = vpop.permute.xlu0 %2120
    %v2122 = vsel %vm1666, %v2121, 0
    %2124 = vmatpush.msra.mxu0 0.0
    %2125 = vmatpush.msra.mxu0 0.0
    %2126 = vmatpush.msra.mxu0 0.0
    %2127 = vmatpush.msra.mxu0 0.0
    %2128 = vmatpush.msra.mxu0 0.0
    %2129 = vmatpush.msra.mxu0 0.0
    %2130 = vmatpush.msra.mxu0 0.0
    %2131 = vmatpush.msra.mxu0 0.0
    %2132 = vmatpush.msra.mxu0 0.0
    %2133 = vmatpush.msra.mxu0 0.0
    %2134 = vmatpush.msra.mxu0 0.0
    %2135 = vmatpush.msra.mxu0 0.0
    %2136 = vmatpush.msra.mxu0 %v1665
    %2137 = vmatpush.msra.mxu0 %v1664
    %2138 = vmatpush.msra.mxu0 %v1663
    %2139 = vmatpush.msra.mxu0 %v1662
    %2140 = vmatmul.f32.gmra.mxu0 %v2122
    %v2141 = vpop.f32.mrf.mxu0
    %v2142 = vadd.f32 0.0, %v2141
    %2143 = vdwg.mxu0
    %v2145 = vrot.slane %v2142, 4
    %v2146 = vrot.slane %v2142, 5
    %v2149 = vadd.f32 %v1660, %v2145
    %v2150 = vadd.f32 %v1661, %v2146
    %v2151 = vxor.u32 %v2149, 2147483648
    %v2152 = vxor.u32 %v2150, 2147483648
    %v2153 = vmul.f32 %v2151, 1.442695
    %v2154 = vpow.pop %v2153
    %v2155 = vmul.f32 %v2152, 1.442695
    %v2156 = vpow.pop %v2155
    %v2157 = vadd.f32 %v2154, 1.0
    %v2158 = vadd.f32 %v2156, 1.0
    %v2159 = vrcp.pop %v2157
    %v2160 = vmul.f32 %v2157, %v2159
    %v2161 = vsub.f32 1.0, %v2160
    %v2162 = vmul.f32 %v2159, %v2161
    %v2163 = vadd.f32 %v2159, %v2162
    %vm2164 = vweird.f32 %v2157
    %vm2165 = vweird.f32 %v2159
    %vm2166 = vmor %vm2164, %vm2165
    %v2167 = vsel %vm2166, %v2159, %v2163
    %v2168 = vand.u32 2147483647, %v2157
    %vm2169 = vcmp.eq.f32.partialorder %v2168, 8.507059e+37
    %v2170 = vand.u32 %v2157, 2147483648
    %v2171 = vor.u32 1.1754944e-38, %v2170
    %v2172 = vsel %vm2169, %v2171, %v2167
    %v2173 = vmul.f32 1.0, %v2172
    %v2174 = vrcp.pop %v2158
    %v2175 = vmul.f32 %v2158, %v2174
    %v2176 = vsub.f32 1.0, %v2175
    %v2177 = vmul.f32 %v2174, %v2176
    %v2178 = vadd.f32 %v2174, %v2177
    %vm2179 = vweird.f32 %v2158
    %vm2180 = vweird.f32 %v2174
    %vm2181 = vmor %vm2179, %vm2180
    %v2182 = vsel %vm2181, %v2174, %v2178
    %v2183 = vand.u32 2147483647, %v2158
    %vm2184 = vcmp.eq.f32.partialorder %v2183, 8.507059e+37
    %v2185 = vand.u32 %v2158, 2147483648
    %v2186 = vor.u32 1.1754944e-38, %v2185
    %v2187 = vsel %vm2184, %v2186, %v2182
    %v2188 = vmul.f32 1.0, %v2187
    %v2189 = vtanh.pop %v2149
    %v2190 = vtanh.pop %v2150
    %v2193 = vrot.slane %v2101, 7
    %v2194 = vrot.slane %v2102, 7
    %v2197 = vmul.f32 %v2173, %v2193
    %v2198 = vmul.f32 %v2188, %v2194
    %2201 = vrot.lane.b32.xlu0 %v2189, 64
    %v2202 = vpop.permute.xlu0 %2201
    %2203 = vrot.lane.b32.xlu0 %v2190, 64
    %v2204 = vpop.permute.xlu0 %2203
    %v2207 = vmul.f32 %v2173, %v2202
    %v2208 = vmul.f32 %v2188, %v2204
    %2211 = vrot.lane.b32.xlu0 %v2207, 32
    %v2212 = vpop.permute.xlu0 %2211
    %2213 = vrot.lane.b32.xlu0 %v2208, 32
    %v2214 = vpop.permute.xlu0 %2213
    %v2217 = vadd.f32 %v2197, %v2212
    %v2218 = vadd.f32 %v2198, %v2214
    %v2219 = vtanh.pop %v2217
    %v2220 = vtanh.pop %v2218
    %2223 = vrot.lane.b32.xlu0 %v2219, 64
    %v2224 = vpop.permute.xlu0 %2223
    %2225 = vrot.lane.b32.xlu0 %v2220, 64
    %v2226 = vpop.permute.xlu0 %2225
    %v2229 = vmul.f32 %v2173, %v2224
    %v2230 = vmul.f32 %v2188, %v2226
    %v2233 = vrot.slane %v2229, 4
    %v2234 = vrot.slane %v2230, 3
    %v2235 = vsel %vm594, %v2234, %v2233
    %2236 = vrot.lane.b32.xlu0 %v2235, 32
    %v2237 = vpop.permute.xlu0 %2236
    %v2238 = vsel %vm1666, %v2237, 0
    %2240 = vmatpush.msra.mxu0 0.0
    %2241 = vmatpush.msra.mxu0 0.0
    %2242 = vmatpush.msra.mxu0 0.0
    %2243 = vmatpush.msra.mxu0 0.0
    %2244 = vmatpush.msra.mxu0 0.0
    %2245 = vmatpush.msra.mxu0 0.0
    %2246 = vmatpush.msra.mxu0 0.0
    %2247 = vmatpush.msra.mxu0 0.0
    %2248 = vmatpush.msra.mxu0 0.0
    %2249 = vmatpush.msra.mxu0 0.0
    %2250 = vmatpush.msra.mxu0 0.0
    %2251 = vmatpush.msra.mxu0 0.0
    %2252 = vmatpush.msra.mxu0 %v1665
    %2253 = vmatpush.msra.mxu0 %v1664
    %2254 = vmatpush.msra.mxu0 %v1663
    %2255 = vmatpush.msra.mxu0 %v1662
    %2256 = vmatmul.f32.gmra.mxu0 %v2238
    %v2257 = vpop.f32.mrf.mxu0
    %v2258 = vadd.f32 0.0, %v2257
    %2259 = vdwg.mxu0
    %v2261 = vrot.slane %v2258, 3
    %v2262 = vrot.slane %v2258, 4
    %v2265 = vadd.f32 %v1660, %v2261
    %v2266 = vadd.f32 %v1661, %v2262
    %v2267 = vxor.u32 %v2265, 2147483648
    %v2268 = vxor.u32 %v2266, 2147483648
    %v2269 = vmul.f32 %v2267, 1.442695
    %v2270 = vpow.pop %v2269
    %v2271 = vmul.f32 %v2268, 1.442695
    %v2272 = vpow.pop %v2271
    %v2273 = vadd.f32 %v2270, 1.0
    %v2274 = vadd.f32 %v2272, 1.0
    %v2275 = vrcp.pop %v2273
    %v2276 = vmul.f32 %v2273, %v2275
    %v2277 = vsub.f32 1.0, %v2276
    %v2278 = vmul.f32 %v2275, %v2277
    %v2279 = vadd.f32 %v2275, %v2278
    %vm2280 = vweird.f32 %v2273
    %vm2281 = vweird.f32 %v2275
    %vm2282 = vmor %vm2280, %vm2281
    %v2283 = vsel %vm2282, %v2275, %v2279
    %v2284 = vand.u32 2147483647, %v2273
    %vm2285 = vcmp.eq.f32.partialorder %v2284, 8.507059e+37
    %v2286 = vand.u32 %v2273, 2147483648
    %v2287 = vor.u32 1.1754944e-38, %v2286
    %v2288 = vsel %vm2285, %v2287, %v2283
    %v2289 = vmul.f32 1.0, %v2288
    %v2290 = vrcp.pop %v2274
    %v2291 = vmul.f32 %v2274, %v2290
    %v2292 = vsub.f32 1.0, %v2291
    %v2293 = vmul.f32 %v2290, %v2292
    %v2294 = vadd.f32 %v2290, %v2293
    %vm2295 = vweird.f32 %v2274
    %vm2296 = vweird.f32 %v2290
    %vm2297 = vmor %vm2295, %vm2296
    %v2298 = vsel %vm2297, %v2290, %v2294
    %v2299 = vand.u32 2147483647, %v2274
    %vm2300 = vcmp.eq.f32.partialorder %v2299, 8.507059e+37
    %v2301 = vand.u32 %v2274, 2147483648
    %v2302 = vor.u32 1.1754944e-38, %v2301
    %v2303 = vsel %vm2300, %v2302, %v2298
    %v2304 = vmul.f32 1.0, %v2303
    %v2305 = vtanh.pop %v2265
    %v2306 = vtanh.pop %v2266
    %v2309 = vrot.slane %v2217, 7
    %v2310 = vrot.slane %v2218, 7
    %v2313 = vmul.f32 %v2289, %v2309
    %v2314 = vmul.f32 %v2304, %v2310
    %2317 = vrot.lane.b32.xlu0 %v2305, 64
    %v2318 = vpop.permute.xlu0 %2317
    %2319 = vrot.lane.b32.xlu0 %v2306, 64
    %v2320 = vpop.permute.xlu0 %2319
    %v2323 = vmul.f32 %v2289, %v2318
    %v2324 = vmul.f32 %v2304, %v2320
    %2327 = vrot.lane.b32.xlu0 %v2323, 32
    %v2328 = vpop.permute.xlu0 %2327
    %2329 = vrot.lane.b32.xlu0 %v2324, 32
    %v2330 = vpop.permute.xlu0 %2329
    %v2333 = vadd.f32 %v2313, %v2328
    %v2334 = vadd.f32 %v2314, %v2330
    %v2335 = vtanh.pop %v2333
    %v2336 = vtanh.pop %v2334
    %2339 = vrot.lane.b32.xlu0 %v2335, 64
    %v2340 = vpop.permute.xlu0 %2339
    %2341 = vrot.lane.b32.xlu0 %v2336, 64
    %v2342 = vpop.permute.xlu0 %2341
    %v2345 = vmul.f32 %v2289, %v2340
    %v2346 = vmul.f32 %v2304, %v2342
    %v2349 = vrot.slane %v2345, 5
    %v2350 = vrot.slane %v2346, 4
    %v2351 = vsel %vm594, %v2350, %v2349
    %2352 = vrot.lane.b32.xlu0 %v2351, 32
    %v2353 = vpop.permute.xlu0 %2352
    %v2354 = vsel %vm1666, %v2353, 0
    %2356 = vmatpush.msra.mxu0 0.0
    %2357 = vmatpush.msra.mxu0 0.0
    %2358 = vmatpush.msra.mxu0 0.0
    %2359 = vmatpush.msra.mxu0 0.0
    %2360 = vmatpush.msra.mxu0 0.0
    %2361 = vmatpush.msra.mxu0 0.0
    %2362 = vmatpush.msra.mxu0 0.0
    %2363 = vmatpush.msra.mxu0 0.0
    %2364 = vmatpush.msra.mxu0 0.0
    %2365 = vmatpush.msra.mxu0 0.0
    %2366 = vmatpush.msra.mxu0 0.0
    %2367 = vmatpush.msra.mxu0 0.0
    %2368 = vmatpush.msra.mxu0 %v1665
    %2369 = vmatpush.msra.mxu0 %v1664
    %2370 = vmatpush.msra.mxu0 %v1663
    %2371 = vmatpush.msra.mxu0 %v1662
    %2372 = vmatmul.f32.gmra.mxu0 %v2354
    %v2373 = vpop.f32.mrf.mxu0
    %v2374 = vadd.f32 0.0, %v2373
    %2375 = vdwg.mxu0
    %v2377 = vrot.slane %v2374, 2
    %v2378 = vrot.slane %v2374, 3
    %v2381 = vadd.f32 %v1660, %v2377
    %v2382 = vadd.f32 %v1661, %v2378
    %v2383 = vxor.u32 %v2381, 2147483648
    %v2384 = vxor.u32 %v2382, 2147483648
    %v2385 = vmul.f32 %v2383, 1.442695
    %v2386 = vpow.pop %v2385
    %v2387 = vmul.f32 %v2384, 1.442695
    %v2388 = vpow.pop %v2387
    %v2389 = vadd.f32 %v2386, 1.0
    %v2390 = vadd.f32 %v2388, 1.0
    %v2391 = vrcp.pop %v2389
    %v2392 = vmul.f32 %v2389, %v2391
    %v2393 = vsub.f32 1.0, %v2392
    %v2394 = vmul.f32 %v2391, %v2393
    %v2395 = vadd.f32 %v2391, %v2394
    %vm2396 = vweird.f32 %v2389
    %vm2397 = vweird.f32 %v2391
    %vm2398 = vmor %vm2396, %vm2397
    %v2399 = vsel %vm2398, %v2391, %v2395
    %v2400 = vand.u32 2147483647, %v2389
    %vm2401 = vcmp.eq.f32.partialorder %v2400, 8.507059e+37
    %v2402 = vand.u32 %v2389, 2147483648
    %v2403 = vor.u32 1.1754944e-38, %v2402
    %v2404 = vsel %vm2401, %v2403, %v2399
    %v2405 = vmul.f32 1.0, %v2404
    %v2406 = vrcp.pop %v2390
    %v2407 = vmul.f32 %v2390, %v2406
    %v2408 = vsub.f32 1.0, %v2407
    %v2409 = vmul.f32 %v2406, %v2408
    %v2410 = vadd.f32 %v2406, %v2409
    %vm2411 = vweird.f32 %v2390
    %vm2412 = vweird.f32 %v2406
    %vm2413 = vmor %vm2411, %vm2412
    %v2414 = vsel %vm2413, %v2406, %v2410
    %v2415 = vand.u32 2147483647, %v2390
    %vm2416 = vcmp.eq.f32.partialorder %v2415, 8.507059e+37
    %v2417 = vand.u32 %v2390, 2147483648
    %v2418 = vor.u32 1.1754944e-38, %v2417
    %v2419 = vsel %vm2416, %v2418, %v2414
    %v2420 = vmul.f32 1.0, %v2419
    %v2421 = vtanh.pop %v2381
    %v2422 = vtanh.pop %v2382
    %v2425 = vrot.slane %v2333, 7
    %v2426 = vrot.slane %v2334, 7
    %v2429 = vmul.f32 %v2405, %v2425
    %v2430 = vmul.f32 %v2420, %v2426
    %2433 = vrot.lane.b32.xlu0 %v2421, 64
    %v2434 = vpop.permute.xlu0 %2433
    %2435 = vrot.lane.b32.xlu0 %v2422, 64
    %v2436 = vpop.permute.xlu0 %2435
    %v2439 = vmul.f32 %v2405, %v2434
    %v2440 = vmul.f32 %v2420, %v2436
    %2443 = vrot.lane.b32.xlu0 %v2439, 32
    %v2444 = vpop.permute.xlu0 %2443
    %2445 = vrot.lane.b32.xlu0 %v2440, 32
    %v2446 = vpop.permute.xlu0 %2445
    %v2449 = vadd.f32 %v2429, %v2444
    %v2450 = vadd.f32 %v2430, %v2446
    %v2451 = vtanh.pop %v2449
    %v2452 = vtanh.pop %v2450
    %2455 = vrot.lane.b32.xlu0 %v2451, 64
    %v2456 = vpop.permute.xlu0 %2455
    %2457 = vrot.lane.b32.xlu0 %v2452, 64
    %v2458 = vpop.permute.xlu0 %2457
    %v2461 = vmul.f32 %v2405, %v2456
    %v2462 = vmul.f32 %v2420, %v2458
    %v2465 = vrot.slane %v2461, 6
    %v2466 = vrot.slane %v2462, 5
    %v2467 = vsel %vm594, %v2466, %v2465
    %2468 = vrot.lane.b32.xlu0 %v2467, 32
    %v2469 = vpop.permute.xlu0 %2468
    %v2470 = vsel %vm1666, %v2469, 0
    %2472 = vmatpush.msra.mxu0 0.0
    %2473 = vmatpush.msra.mxu0 0.0
    %2474 = vmatpush.msra.mxu0 0.0
    %2475 = vmatpush.msra.mxu0 0.0
    %2476 = vmatpush.msra.mxu0 0.0
    %2477 = vmatpush.msra.mxu0 0.0
    %2478 = vmatpush.msra.mxu0 0.0
    %2479 = vmatpush.msra.mxu0 0.0
    %2480 = vmatpush.msra.mxu0 0.0
    %2481 = vmatpush.msra.mxu0 0.0
    %2482 = vmatpush.msra.mxu0 0.0
    %2483 = vmatpush.msra.mxu0 0.0
    %2484 = vmatpush.msra.mxu0 %v1665
    %2485 = vmatpush.msra.mxu0 %v1664
    %2486 = vmatpush.msra.mxu0 %v1663
    %2487 = vmatpush.msra.mxu0 %v1662
    %2488 = vmatmul.f32.gmra.mxu0 %v2470
    %v2489 = vpop.f32.mrf.mxu0
    %v2490 = vadd.f32 0.0, %v2489
    %2491 = vdwg.mxu0
    %v2493 = vrot.slane %v2490, 1
    %v2494 = vrot.slane %v2490, 2
    %v2497 = vadd.f32 %v1660, %v2493
    %v2498 = vadd.f32 %v1661, %v2494
    %v2499 = vxor.u32 %v2497, 2147483648
    %v2500 = vxor.u32 %v2498, 2147483648
    %v2501 = vmul.f32 %v2499, 1.442695
    %v2502 = vpow.pop %v2501
    %v2503 = vmul.f32 %v2500, 1.442695
    %v2504 = vpow.pop %v2503
    %v2505 = vadd.f32 %v2502, 1.0
    %v2506 = vadd.f32 %v2504, 1.0
    %v2507 = vrcp.pop %v2505
    %v2508 = vmul.f32 %v2505, %v2507
    %v2509 = vsub.f32 1.0, %v2508
    %v2510 = vmul.f32 %v2507, %v2509
    %v2511 = vadd.f32 %v2507, %v2510
    %vm2512 = vweird.f32 %v2505
    %vm2513 = vweird.f32 %v2507
    %vm2514 = vmor %vm2512, %vm2513
    %v2515 = vsel %vm2514, %v2507, %v2511
    %v2516 = vand.u32 2147483647, %v2505
    %vm2517 = vcmp.eq.f32.partialorder %v2516, 8.507059e+37
    %v2518 = vand.u32 %v2505, 2147483648
    %v2519 = vor.u32 1.1754944e-38, %v2518
    %v2520 = vsel %vm2517, %v2519, %v2515
    %v2521 = vmul.f32 1.0, %v2520
    %v2522 = vrcp.pop %v2506
    %v2523 = vmul.f32 %v2506, %v2522
    %v2524 = vsub.f32 1.0, %v2523
    %v2525 = vmul.f32 %v2522, %v2524
    %v2526 = vadd.f32 %v2522, %v2525
    %vm2527 = vweird.f32 %v2506
    %vm2528 = vweird.f32 %v2522
    %vm2529 = vmor %vm2527, %vm2528
    %v2530 = vsel %vm2529, %v2522, %v2526
    %v2531 = vand.u32 2147483647, %v2506
    %vm2532 = vcmp.eq.f32.partialorder %v2531, 8.507059e+37
    %v2533 = vand.u32 %v2506, 2147483648
    %v2534 = vor.u32 1.1754944e-38, %v2533
    %v2535 = vsel %vm2532, %v2534, %v2530
    %v2536 = vmul.f32 1.0, %v2535
    %v2537 = vtanh.pop %v2497
    %v2538 = vtanh.pop %v2498
    %v2541 = vrot.slane %v2449, 7
    %v2542 = vrot.slane %v2450, 7
    %v2545 = vmul.f32 %v2521, %v2541
    %v2546 = vmul.f32 %v2536, %v2542
    %2549 = vrot.lane.b32.xlu0 %v2537, 64
    %v2550 = vpop.permute.xlu0 %2549
    %2551 = vrot.lane.b32.xlu0 %v2538, 64
    %v2552 = vpop.permute.xlu0 %2551
    %v2555 = vmul.f32 %v2521, %v2550
    %v2556 = vmul.f32 %v2536, %v2552
    %2559 = vrot.lane.b32.xlu0 %v2555, 32
    %v2560 = vpop.permute.xlu0 %2559
    %2561 = vrot.lane.b32.xlu0 %v2556, 32
    %v2562 = vpop.permute.xlu0 %2561
    %v2565 = vadd.f32 %v2545, %v2560
    %v2566 = vadd.f32 %v2546, %v2562
    %v2567 = vtanh.pop %v2565
    %v2568 = vtanh.pop %v2566
    %2571 = vrot.lane.b32.xlu0 %v2567, 64
    %v2572 = vpop.permute.xlu0 %2571
    %2573 = vrot.lane.b32.xlu0 %v2568, 64
    %v2574 = vpop.permute.xlu0 %2573
    %v2577 = vmul.f32 %v2521, %v2572
    %v2578 = vmul.f32 %v2536, %v2574
    %v2579 = vld [vmem:[#allocation17] sm:$0xff]
    %v2580 = vld [vmem:[#allocation17 + $0x8] sm:$0xff]
    %v2581 = vld [vmem:[#allocation17 + $0x10] sm:$0xff]
    %v2582 = vld [vmem:[#allocation17 + $0x18] sm:$0xff]
    %v2585 = vrot.slane %v2577, 7
    %v2586 = vrot.slane %v2578, 6
    %v2587 = vsel %vm594, %v2586, %v2585
    %2588 = vrot.lane.b32.xlu0 %v2587, 32
    %v2589 = vpop.permute.xlu0 %2588
    %v2590 = vsel %vm1666, %v2589, 0
    %2592 = vmatpush.msra.mxu0 0.0
    %2593 = vmatpush.msra.mxu0 0.0
    %2594 = vmatpush.msra.mxu0 0.0
    %2595 = vmatpush.msra.mxu0 0.0
    %2596 = vmatpush.msra.mxu0 0.0
    %2597 = vmatpush.msra.mxu0 0.0
    %2598 = vmatpush.msra.mxu0 0.0
    %2599 = vmatpush.msra.mxu0 0.0
    %2600 = vmatpush.msra.mxu0 0.0
    %2601 = vmatpush.msra.mxu0 0.0
    %2602 = vmatpush.msra.mxu0 0.0
    %2603 = vmatpush.msra.mxu0 0.0
    %2604 = vmatpush.msra.mxu0 %v2582
    %2605 = vmatpush.msra.mxu0 %v2581
    %2606 = vmatpush.msra.mxu0 %v2580
    %2607 = vmatpush.msra.mxu0 %v2579
    %2608 = vmatmul.f32.gmra.mxu0 %v2590
    %v2609 = vpop.f32.mrf.mxu0
    %v2610 = vadd.f32 0.0, %v2609
    %2611 = vdwg.mxu0
    %v2612 = vadd.f32 %v1637, %v2610
    %v2613 = vsel %vm284, %v2612, -inf
    %2614 = vmax.xlane.f32.xlu0 %v2613
    %v2615 = vpop.xlane.xlu0 %2614
    %v2616 = vsub.f32 %v2612, %v2615
    %v2617 = vmul.f32 %v2616, 1.442695
    %v2618 = vpow.pop %v2617
    %v2619 = vsel %vm284, %v2618, 0.0
    %2620 = vadd.xlane.f32.xlu0 %v2619
    %v2621 = vpop.xlane.xlu0 %2620
    %v2622 = vlog2.pop %v2621
    %v2623 = vmul.f32 %v2622, 0.6931472
    %v2624 = vsub.f32 %v2616, %v2623
    %2625 = vst [vmem:[#allocation19] sm:$0x3] %v2624
    // Predicated region
    $region106: #{fwd.1} parent=1 // pred_check
      _
    $region107: #{fwd.1} parent=1 // pred_check_branch
      %2627 = sbr.rel (0) target = $region109
    $region108: #{fwd.1} parent=1 // pred_region
      %2629 = vsyncadd [#allocation4], 0
      %s2631 = sshll.u32 [#allocation19], 4
      %s2632 = int_to_ptr.vmem [resolvable:$true] %s2631
      %s2633 = sshll.u32 %s16, 4
      %s2634 = int_to_ptr.hbm [resolvable:$true] %s2633
      %2636 = dma.vmem_to_hbm [thread:$0]  %s2632, 32, %s2634, [#allocation4]
    $region109: #{fwd.1} parent=1 // pred_fallthru
      _
    // Predicated region
    $region110: #{fwd.1} parent=1 // pred_check
      _
    $region111: #{fwd.1} parent=1 // pred_check_branch
      %2638 = sbr.rel (0) target = $region113
    $region112: #{fwd.1} parent=1 // pred_region
      %2640 = dma.done [#allocation4], 32
    $region113: #{fwd.1} parent=1 // pred_fallthru
      _
    %2641 = vsyncpa [#allocation3], 1
    %2642 = vsyncpa [#allocation6], 1
    %2643 = vsyncpa [#allocation9], 1
    %2644 = vsyncpa [#allocation12], 1
    %2645 = vsyncpa [#allocation15], 1
    %2646 = vsyncpa [#allocation18], 1
    %2647 = vsyncpa [#allocation4], 1

</llo_original>
